<compile_context>
chip_gen: v7x
topology: tpu7x:2x2x1
jax: 0.10.0
libtpu: 0.0.40
codegen_flags: <defaults>
</compile_context>

<pallas_src>
import math
import functools

import jax
import jax.numpy as jnp
from jax.experimental import pallas as pl
from jax.experimental.pallas import tpu as pltpu


def _round_up(x, m):
    return ((x + m - 1) // m) * m


# ----------------------------------------------------------------------------
# Fused kernel: patch-embed + LayerNorm + ParallelAttention decoder
# (one batch element per grid step)
# ----------------------------------------------------------------------------
def _pat_batch_kernel(patches_ref, mask_ref, w_ref, b_ref, g_ref, beta_ref,
                      q_ref, wk_ref, bk_ref, wc_ref, bc_ref,
                      logits_ref, cmap_ref, *, scale):
    # patches_ref: (Lpad, PPc_pad) bf16      mask_ref: (1, 1, Lpad) f32
    # w_ref: (PPc_pad, D)  b/g/beta/bk: (1, D)  q: (T, D)  wk: (D, D)
    # wc: (D, NCp)  bc: (1, NCp)
    # logits_ref: (1, T, NCp) f32    cmap_ref: (1, T, Lpad) f32
    x = patches_ref[...]
    cdt = x.dtype

    # -------- encoder stand-in: patch-embed matmul + one-pass LayerNorm -----
    # TODO(synk): full focalnet_tiny_lrf block stack not reproduced (no source).
    feat = jnp.dot(x, w_ref[...], preferred_element_type=jnp.float32)
    feat = feat + b_ref[...]                                   # (Lpad, D) f32
    mu = jnp.mean(feat, axis=-1, keepdims=True)
    ms = jnp.mean(feat * feat, axis=-1, keepdims=True)
    var = ms - mu * mu
    feat = (feat - mu) * jax.lax.rsqrt(var + 1e-5)
    feat = feat * g_ref[...] + beta_ref[...]
    feat_c = feat.astype(cdt)                                  # MXU operand

    # -------- decoder: K projection -----------------------------------------
    k = jnp.dot(feat_c, wk_ref[...], preferred_element_type=jnp.float32)
    k_c = (k + bk_ref[...]).astype(cdt)                        # (Lpad, D)

    # scores: (T, Lpad) = q @ k^T, contracting last dims (no explicit transpose)
    scores = jnp.einsum('td,ld->tl', q_ref[...], k_c,
                        preferred_element_type=jnp.float32) * scale
    m = mask_ref[0]                                            # (1, Lpad)
    scores = jnp.where(m > 0.0, scores, -1e9)
    scores = scores - jnp.max(scores, axis=-1, keepdims=True)
    p = jnp.exp(scores) * m               # padded / masked tokens -> exactly 0
    denom = jnp.sum(p, axis=-1, keepdims=True)
    denom = jnp.where(denom > 0.0, denom, 1.0)   # guard fully-masked rows
    p = p * pl.reciprocal(denom, approx=True)                  # (T, Lpad)

    glimpse = jnp.einsum('tl,ld->td', p.astype(cdt), feat_c,
                         preferred_element_type=jnp.float32)   # (T, D)
    logits = jnp.dot(glimpse.astype(cdt), wc_ref[...],
                     preferred_element_type=jnp.float32) + bc_ref[...]

    logits_ref[...] = logits[None].astype(logits_ref.dtype)
    cmap_ref[...] = p[None].astype(cmap_ref.dtype)


def pat_forward_fused(patches2d, mask3, w, b, g, beta, q, wk, bk, wc, bc,
                      *, B, Lpad, T):
    PPc_pad = patches2d.shape[1]
    D = w.shape[1]
    NCp = wc.shape[1]
    kernel = functools.partial(_pat_batch_kernel, scale=1.0 / math.sqrt(D))

    def resident(shape):
        # weights: same block every step -> stays VMEM-resident across the grid
        return pl.BlockSpec(shape, lambda i, _n=len(shape): (0,) * _n)

    logits, cmaps = pl.pallas_call(
        kernel,
        out_shape=(
            jax.ShapeDtypeStruct((B, T, NCp), jnp.float32),
            jax.ShapeDtypeStruct((B, T, Lpad), jnp.float32),
        ),
        grid_spec=pltpu.PrefetchScalarGridSpec(
            num_scalar_prefetch=0,
            grid=(B,),
            in_specs=[
                pl.BlockSpec((Lpad, PPc_pad), lambda i: (i, 0)),   # patches
                pl.BlockSpec((1, 1, Lpad), lambda i: (i, 0, 0)),   # token mask
                resident((PPc_pad, D)), resident((1, D)),
                resident((1, D)), resident((1, D)),
                resident((T, D)), resident((D, D)), resident((1, D)),
                resident((D, NCp)), resident((1, NCp)),
            ],
            out_specs=[
                pl.BlockSpec((1, T, NCp), lambda i: (i, 0, 0)),
                pl.BlockSpec((1, T, Lpad), lambda i: (i, 0, 0)),
            ],
        ),
        compiler_params=pltpu.CompilerParams(
            dimension_semantics=("parallel",),
            vmem_limit_bytes=32 * 1024 * 1024,
        ),
    )(patches2d, mask3, w, b, g, beta, q, wk, bk, wc, bc)
    return logits, cmaps


# ----------------------------------------------------------------------------
# Parameters: init once, pad/cast once (hoisted out of the forward path)
# ----------------------------------------------------------------------------
def init_params(key, *, in_ch, patch, feat_dim, num_classes, max_tokens):
    ks = jax.random.split(key, 4)
    std = 0.02
    trunc = lambda k, s: std * jax.random.truncated_normal(k, -2.0, 2.0, s,
                                                           jnp.float32)
    PPc = patch * patch * in_ch
    return dict(
        w_embed=trunc(ks[0], (PPc, feat_dim)),
        b_embed=jnp.zeros((1, feat_dim), jnp.float32),
        ln_g=jnp.ones((1, feat_dim), jnp.float32),
        ln_b=jnp.zeros((1, feat_dim), jnp.float32),
        q=trunc(ks[1], (max_tokens, feat_dim)),
        wk=trunc(ks[2], (feat_dim, feat_dim)),
        bk=jnp.zeros((1, feat_dim), jnp.float32),
        wc=trunc(ks[3], (feat_dim, num_classes)),
        bc=jnp.zeros((1, num_classes), jnp.float32),
    )


def prepare_params(params, *, patch, in_ch, compute_dtype=jnp.bfloat16):
    """One-time weight padding / bf16 casting (not paid per forward call)."""
    PPc = patch * patch * in_ch
    PPc_pad = _round_up(PPc, 128)
    D = params["w_embed"].shape[1]
    NC = params["wc"].shape[1]
    NCp = _round_up(NC, 128)

    w_pad = jnp.zeros((PPc_pad, D), jnp.float32).at[:PPc].set(params["w_embed"])
    wc_pad = jnp.zeros((D, NCp), jnp.float32).at[:, :NC].set(params["wc"])
    bc_pad = jnp.zeros((1, NCp), jnp.float32).at[:, :NC].set(params["bc"])
    return dict(
        w_embed=w_pad.astype(compute_dtype),
        b_embed=params["b_embed"],
        ln_g=params["ln_g"],
        ln_b=params["ln_b"],
        q=params["q"].astype(compute_dtype),
        wk=params["wk"].astype(compute_dtype),
        bk=params["bk"],
        wc=wc_pad.astype(compute_dtype),
        bc=bc_pad,
        num_classes=NC,
    )


# ----------------------------------------------------------------------------
# Forward: patch extraction, mask downsample, padding -> fused kernel
# ----------------------------------------------------------------------------
def pat_model_forward(prepped, x, mask, patch, *, compute_dtype=jnp.bfloat16):
    # x: [B, C, H, W] (NCHW, PyTorch convention), mask: [B, H, W] (1 = valid)
    B, C, H, W = x.shape
    Hp, Wp = H // patch, W // patch
    L = Hp * Wp
    Lpad = _round_up(L, 128)
    PPc = patch * patch * C
    PPc_pad = prepped["w_embed"].shape[0]
    T = prepped["q"].shape[0]
    NC = int(prepped["num_classes"])

    # NCHW -> NHWC -> non-overlapping P x P patches -> (B, L, P*P*C)
    x_nhwc = jnp.transpose(x, (0, 2, 3, 1))
    patches = x_nhwc.reshape(B, Hp, patch, Wp, patch, C)
    patches = jnp.transpose(patches, (0, 1, 3, 2, 4, 5)).reshape(B, L, PPc)
    # pad tokens (L -> 128) and features (PPc -> 128): lane-dense stores,
    # full-K MXU contraction, 128-sublane row blocks per grid step.
    patches = jnp.pad(patches, ((0, 0), (0, Lpad - L), (0, PPc_pad - PPc)))
    patches2d = patches.reshape(B * Lpad, PPc_pad).astype(compute_dtype)

    # pixel mask -> token mask (patch valid if any pixel valid), padded to Lpad
    mask_ds = mask.reshape(B, Hp, patch, Wp, patch).max(axis=(2, 4)).reshape(B, L)
    mask3 = jnp.pad(mask_ds, ((0, 0), (0, Lpad - L))).reshape(B, 1, Lpad)
    mask3 = mask3.astype(jnp.float32)

    logits_pad, cmap_pad = pat_forward_fused(
        patches2d, mask3,
        prepped["w_embed"], prepped["b_embed"], prepped["ln_g"], prepped["ln_b"],
        prepped["q"], prepped["wk"], prepped["bk"], prepped["wc"], prepped["bc"],
        B=B, Lpad=Lpad, T=T)

    return dict(logits=logits_pad[:, :, :NC], char_maps=cmap_pad[:, :, :L])


if __name__ == "__main__":
    key = jax.random.PRNGKey(0)
    B, C, H, W = 2, 3, 32, 32
    patch = 4
    feat_dim = 128            # lane-dense hidden size
    num_classes = 10
    max_tokens = 8

    k_x, k_p = jax.random.split(key)
    x = jax.random.normal(k_x, (B, C, H, W), jnp.float32)
    # valid mask: second sample has the right half padded out
    mask = jnp.ones((B, H, W), jnp.float32)
    mask = mask.at[1, :, W // 2:].set(0.0)

    params = init_params(k_p, in_ch=C, patch=patch, feat_dim=feat_dim,
                         num_classes=num_classes, max_tokens=max_tokens)
    prepped = prepare_params(params, patch=patch, in_ch=C)

    out = pat_model_forward(prepped, x, mask, patch)
    jax.block_until_ready(out)

    L = (H // patch) * (W // patch)
    assert out["logits"].shape == (B, max_tokens, num_classes)
    assert out["char_maps"].shape == (B, max_tokens, L)
    # attention maps must be a valid masked softmax
    # (atol loosened vs 1e-4 to accommodate the EUP approximate reciprocal)
    assert bool(jnp.allclose(out["char_maps"].sum(-1), 1.0, atol=2e-3))
    # masked-out tokens receive (exactly) zero attention
    tok_mask = mask.reshape(B, H // patch, patch, W // patch, patch
                            ).max(axis=(2, 4)).reshape(B, L)
    attn_on_pad = (out["char_maps"] * (1.0 - tok_mask)[:, None, :]).sum(-1)
    assert bool(jnp.all(attn_on_pad < 1e-5))
    print("KERNEL_OK")
</pallas_src>

<mosaic_0001>
module attributes {stable_mosaic.version = 11 : i64} {
  func.func @_pat_batch_kernel(%arg0: i32, %arg1: memref<128x128xbf16, #tpu.memory_space<vmem>>, %arg2: memref<1x1x128xf32, #tpu.memory_space<vmem>>, %arg3: memref<128x128xbf16, #tpu.memory_space<vmem>>, %arg4: memref<1x128xf32, #tpu.memory_space<vmem>>, %arg5: memref<1x128xf32, #tpu.memory_space<vmem>>, %arg6: memref<1x128xf32, #tpu.memory_space<vmem>>, %arg7: memref<8x128xbf16, #tpu.memory_space<vmem>>, %arg8: memref<128x128xbf16, #tpu.memory_space<vmem>>, %arg9: memref<1x128xf32, #tpu.memory_space<vmem>>, %arg10: memref<128x128xbf16, #tpu.memory_space<vmem>>, %arg11: memref<1x128xf32, #tpu.memory_space<vmem>>, %arg12: memref<1x8x128xf32, #tpu.memory_space<vmem>>, %arg13: memref<1x8x128xf32, #tpu.memory_space<vmem>>) attributes {dimension_semantics = [#tpu.dimension_semantics<parallel>], iteration_bounds = array<i64: 2>, scalar_prefetch = 0 : i64, scratch_operands = 0 : i64, tpu.core_type = #tpu.core_type<tc>, window_params = [{transform_indices = @transform_0, window_bounds = array<i64: 128, 128>}, {transform_indices = @transform_1, window_bounds = array<i64: 1, 1, 128>}, {pipeline_mode = #tpu.pipeline_mode<synchronous>, transform_indices = @transform_2, window_bounds = array<i64: 128, 128>}, {pipeline_mode = #tpu.pipeline_mode<synchronous>, transform_indices = @transform_3, window_bounds = array<i64: 1, 128>}, {pipeline_mode = #tpu.pipeline_mode<synchronous>, transform_indices = @transform_4, window_bounds = array<i64: 1, 128>}, {pipeline_mode = #tpu.pipeline_mode<synchronous>, transform_indices = @transform_5, window_bounds = array<i64: 1, 128>}, {pipeline_mode = #tpu.pipeline_mode<synchronous>, transform_indices = @transform_6, window_bounds = array<i64: 8, 128>}, {pipeline_mode = #tpu.pipeline_mode<synchronous>, transform_indices = @transform_7, window_bounds = array<i64: 128, 128>}, {pipeline_mode = #tpu.pipeline_mode<synchronous>, transform_indices = @transform_8, window_bounds = array<i64: 1, 128>}, {pipeline_mode = #tpu.pipeline_mode<synchronous>, transform_indices = @transform_9, window_bounds = array<i64: 128, 128>}, {pipeline_mode = #tpu.pipeline_mode<synchronous>, transform_indices = @transform_10, window_bounds = array<i64: 1, 128>}, {transform_indices = @transform_11, window_bounds = array<i64: 1, 8, 128>}, {transform_indices = @transform_12, window_bounds = array<i64: 1, 8, 128>}]} {
    %c0 = arith.constant 0 : index
    %c0_0 = arith.constant 0 : index
    %0 = vector.load %arg1[%c0, %c0_0] : memref<128x128xbf16, #tpu.memory_space<vmem>>, vector<128x128xbf16>
    %c0_1 = arith.constant 0 : index
    %c0_2 = arith.constant 0 : index
    %1 = vector.load %arg3[%c0_1, %c0_2] : memref<128x128xbf16, #tpu.memory_space<vmem>>, vector<128x128xbf16>
    %cst = arith.constant dense<0.000000e+00> : vector<128x128xf32>
    %2 = tpu.matmul %0, %1, %cst {dimension_numbers = #tpu.dot_dimension_numbers<[1], [0], [0], [1], [0, 0, 1, 1], [], []>} : vector<128x128xbf16>, vector<128x128xbf16>, vector<128x128xf32> -> vector<128x128xf32>
    %c0_3 = arith.constant 0 : index
    %c0_4 = arith.constant 0 : index
    %3 = vector.load %arg4[%c0_3, %c0_4] : memref<1x128xf32, #tpu.memory_space<vmem>>, vector<1x128xf32>
    %4 = vector.broadcast %3 : vector<1x128xf32> to vector<128x128xf32>
    %5 = arith.addf %2, %4 : vector<128x128xf32>
    %cst_5 = arith.constant dense<0.000000e+00> : vector<128xf32>
    %6 = vector.multi_reduction <add>, %5, %cst_5 [1] : vector<128x128xf32> to vector<128xf32>
    %7 = vector.shape_cast %6 : vector<128xf32> to vector<128x1xf32>
    %cst_6 = arith.constant 1.280000e+02 : f32
    %8 = vector.broadcast %cst_6 : f32 to vector<128x1xf32>
    %9 = arith.divf %7, %8 : vector<128x1xf32>
    %10 = arith.mulf %5, %5 : vector<128x128xf32>
    %cst_7 = arith.constant dense<0.000000e+00> : vector<128xf32>
    %11 = vector.multi_reduction <add>, %10, %cst_7 [1] : vector<128x128xf32> to vector<128xf32>
    %12 = vector.shape_cast %11 : vector<128xf32> to vector<128x1xf32>
    %cst_8 = arith.constant 1.280000e+02 : f32
    %13 = vector.broadcast %cst_8 : f32 to vector<128x1xf32>
    %14 = arith.divf %12, %13 : vector<128x1xf32>
    %15 = arith.mulf %9, %9 : vector<128x1xf32>
    %16 = arith.subf %14, %15 : vector<128x1xf32>
    %17 = vector.broadcast %9 : vector<128x1xf32> to vector<128x128xf32>
    %18 = arith.subf %5, %17 : vector<128x128xf32>
    %cst_9 = arith.constant 9.99999974E-6 : f32
    %19 = vector.broadcast %cst_9 : f32 to vector<128x1xf32>
    %20 = arith.addf %16, %19 : vector<128x1xf32>
    %21 = math.rsqrt %20 : vector<128x1xf32>
    %22 = vector.broadcast %21 : vector<128x1xf32> to vector<128x128xf32>
    %23 = arith.mulf %18, %22 : vector<128x128xf32>
    %c0_10 = arith.constant 0 : index
    %c0_11 = arith.constant 0 : index
    %24 = vector.load %arg5[%c0_10, %c0_11] : memref<1x128xf32, #tpu.memory_space<vmem>>, vector<1x128xf32>
    %25 = vector.broadcast %24 : vector<1x128xf32> to vector<128x128xf32>
    %26 = arith.mulf %23, %25 : vector<128x128xf32>
    %c0_12 = arith.constant 0 : index
    %c0_13 = arith.constant 0 : index
    %27 = vector.load %arg6[%c0_12, %c0_13] : memref<1x128xf32, #tpu.memory_space<vmem>>, vector<1x128xf32>
    %28 = vector.broadcast %27 : vector<1x128xf32> to vector<128x128xf32>
    %29 = arith.addf %26, %28 : vector<128x128xf32>
    %30 = arith.truncf %29 : vector<128x128xf32> to vector<128x128xbf16>
    %c0_14 = arith.constant 0 : index
    %c0_15 = arith.constant 0 : index
    %31 = vector.load %arg8[%c0_14, %c0_15] : memref<128x128xbf16, #tpu.memory_space<vmem>>, vector<128x128xbf16>
    %cst_16 = arith.constant dense<0.000000e+00> : vector<128x128xf32>
    %32 = tpu.matmul %30, %31, %cst_16 {dimension_numbers = #tpu.dot_dimension_numbers<[1], [0], [0], [1], [0, 0, 1, 1], [], []>} : vector<128x128xbf16>, vector<128x128xbf16>, vector<128x128xf32> -> vector<128x128xf32>
    %c0_17 = arith.constant 0 : index
    %c0_18 = arith.constant 0 : index
    %33 = vector.load %arg9[%c0_17, %c0_18] : memref<1x128xf32, #tpu.memory_space<vmem>>, vector<1x128xf32>
    %34 = vector.broadcast %33 : vector<1x128xf32> to vector<128x128xf32>
    %35 = arith.addf %32, %34 : vector<128x128xf32>
    %36 = arith.truncf %35 : vector<128x128xf32> to vector<128x128xbf16>
    %c0_19 = arith.constant 0 : index
    %c0_20 = arith.constant 0 : index
    %37 = vector.load %arg7[%c0_19, %c0_20] : memref<8x128xbf16, #tpu.memory_space<vmem>>, vector<8x128xbf16>
    "tpu.trace_start"() <{level = 10 : i32, message = "td,ld->tl"}> : () -> ()
    %cst_21 = arith.constant dense<0.000000e+00> : vector<8x128xf32>
    %38 = tpu.matmul %37, %36, %cst_21 {dimension_numbers = #tpu.dot_dimension_numbers<[1], [1], [0], [0], [0, 0, 1, 0], [], []>} : vector<8x128xbf16>, vector<128x128xbf16>, vector<8x128xf32> -> vector<8x128xf32>
    "tpu.trace_stop"() : () -> ()
    %cst_22 = arith.constant 0.0883883461 : f32
    %39 = vector.broadcast %cst_22 : f32 to vector<8x128xf32>
    %40 = arith.mulf %38, %39 : vector<8x128xf32>
    %c0_23 = arith.constant 0 : index
    %c0_24 = arith.constant 0 : index
    %c0_25 = arith.constant 0 : index
    %41 = vector.load %arg2[%c0_23, %c0_24, %c0_25] : memref<1x1x128xf32, #tpu.memory_space<vmem>>, vector<1x1x128xf32>
    %42 = vector.shape_cast %41 : vector<1x1x128xf32> to vector<1x128xf32>
    %cst_26 = arith.constant 0.000000e+00 : f32
    %43 = vector.broadcast %cst_26 : f32 to vector<1x128xf32>
    %44 = arith.cmpf ogt, %42, %43 : vector<1x128xf32>
    %cst_27 = arith.constant -1.000000e+09 : f32
    %45 = vector.shape_cast %44 : vector<1x128xi1> to vector<1x128xi1>
    %46 = vector.broadcast %45 : vector<1x128xi1> to vector<8x128xi1>
    %47 = vector.broadcast %cst_27 : f32 to vector<8x128xf32>
    %48 = arith.select %46, %40, %47 : vector<8x128xi1>, vector<8x128xf32>
    %cst_28 = arith.constant dense<0xFF800000> : vector<8xf32>
    %49 = vector.multi_reduction <maximumf>, %48, %cst_28 [1] : vector<8x128xf32> to vector<8xf32>
    %50 = vector.shape_cast %49 : vector<8xf32> to vector<8x1xf32>
    %51 = vector.broadcast %50 : vector<8x1xf32> to vector<8x128xf32>
    %52 = arith.subf %48, %51 : vector<8x128xf32>
    %53 = math.exp %52 : vector<8x128xf32>
    %54 = vector.broadcast %42 : vector<1x128xf32> to vector<8x128xf32>
    %55 = arith.mulf %53, %54 : vector<8x128xf32>
    %cst_29 = arith.constant dense<0.000000e+00> : vector<8xf32>
    %56 = vector.multi_reduction <add>, %55, %cst_29 [1] : vector<8x128xf32> to vector<8xf32>
    %57 = vector.shape_cast %56 : vector<8xf32> to vector<8x1xf32>
    %cst_30 = arith.constant 0.000000e+00 : f32
    %58 = vector.broadcast %cst_30 : f32 to vector<8x1xf32>
    %59 = arith.cmpf ogt, %57, %58 : vector<8x1xf32>
    %cst_31 = arith.constant 1.000000e+00 : f32
    %60 = vector.broadcast %cst_31 : f32 to vector<8x1xf32>
    %61 = arith.select %59, %57, %60 : vector<8x1xi1>, vector<8x1xf32>
    %62 = tpu.reciprocal %61 {approx = true} : vector<8x1xf32> -> vector<8x1xf32>
    %63 = vector.broadcast %62 : vector<8x1xf32> to vector<8x128xf32>
    %64 = arith.mulf %55, %63 : vector<8x128xf32>
    %65 = arith.truncf %64 : vector<8x128xf32> to vector<8x128xbf16>
    "tpu.trace_start"() <{level = 10 : i32, message = "tl,ld->td"}> : () -> ()
    %cst_32 = arith.constant dense<0.000000e+00> : vector<8x128xf32>
    %66 = tpu.matmul %65, %30, %cst_32 {dimension_numbers = #tpu.dot_dimension_numbers<[1], [0], [0], [1], [0, 0, 1, 1], [], []>} : vector<8x128xbf16>, vector<128x128xbf16>, vector<8x128xf32> -> vector<8x128xf32>
    "tpu.trace_stop"() : () -> ()
    %67 = arith.truncf %66 : vector<8x128xf32> to vector<8x128xbf16>
    %c0_33 = arith.constant 0 : index
    %c0_34 = arith.constant 0 : index
    %68 = vector.load %arg10[%c0_33, %c0_34] : memref<128x128xbf16, #tpu.memory_space<vmem>>, vector<128x128xbf16>
    %cst_35 = arith.constant dense<0.000000e+00> : vector<8x128xf32>
    %69 = tpu.matmul %67, %68, %cst_35 {dimension_numbers = #tpu.dot_dimension_numbers<[1], [0], [0], [1], [0, 0, 1, 1], [], []>} : vector<8x128xbf16>, vector<128x128xbf16>, vector<8x128xf32> -> vector<8x128xf32>
    %c0_36 = arith.constant 0 : index
    %c0_37 = arith.constant 0 : index
    %70 = vector.load %arg11[%c0_36, %c0_37] : memref<1x128xf32, #tpu.memory_space<vmem>>, vector<1x128xf32>
    %71 = vector.broadcast %70 : vector<1x128xf32> to vector<8x128xf32>
    %72 = arith.addf %69, %71 : vector<8x128xf32>
    %73 = vector.shape_cast %72 : vector<8x128xf32> to vector<1x8x128xf32>
    %c0_38 = arith.constant 0 : index
    %c0_39 = arith.constant 0 : index
    %c0_40 = arith.constant 0 : index
    %74 = vector.load %arg12[%c0_38, %c0_39, %c0_40] : memref<1x8x128xf32, #tpu.memory_space<vmem>>, vector<1x8x128xf32>
    tpu.vector_store %arg12[%c0_38, %c0_39, %c0_40], %73 {strides = array<i32>} : memref<1x8x128xf32, #tpu.memory_space<vmem>>, vector<1x8x128xf32>,
    %75 = vector.shape_cast %64 : vector<8x128xf32> to vector<1x8x128xf32>
    %c0_41 = arith.constant 0 : index
    %c0_42 = arith.constant 0 : index
    %c0_43 = arith.constant 0 : index
    %76 = vector.load %arg13[%c0_41, %c0_42, %c0_43] : memref<1x8x128xf32, #tpu.memory_space<vmem>>, vector<1x8x128xf32>
    tpu.vector_store %arg13[%c0_41, %c0_42, %c0_43], %75 {strides = array<i32>} : memref<1x8x128xf32, #tpu.memory_space<vmem>>, vector<1x8x128xf32>,
    return
  }
  func.func @transform_0(%arg0: i32) -> (i32, i32) {
    %c0_i32 = arith.constant 0 : i32
    %c0_i32_0 = arith.constant 0 : i32
    return %arg0, %c0_i32 : i32, i32
  }
  func.func @transform_1(%arg0: i32) -> (i32, i32, i32) {
    %c0_i32 = arith.constant 0 : i32
    %c0_i32_0 = arith.constant 0 : i32
    %c0_i32_1 = arith.constant 0 : i32
    return %arg0, %c0_i32, %c0_i32_0 : i32, i32, i32
  }
  func.func @transform_2(%arg0: i32) -> (i32, i32) {
    %c0_i32 = arith.constant 0 : i32
    %c0_i32_0 = arith.constant 0 : i32
    %c0_i32_1 = arith.constant 0 : i32
    return %c0_i32, %c0_i32_0 : i32, i32
  }
  func.func @transform_3(%arg0: i32) -> (i32, i32) {
    %c0_i32 = arith.constant 0 : i32
    %c0_i32_0 = arith.constant 0 : i32
    %c0_i32_1 = arith.constant 0 : i32
    return %c0_i32, %c0_i32_0 : i32, i32
  }
  func.func @transform_4(%arg0: i32) -> (i32, i32) {
    %c0_i32 = arith.constant 0 : i32
    %c0_i32_0 = arith.constant 0 : i32
    %c0_i32_1 = arith.constant 0 : i32
    return %c0_i32, %c0_i32_0 : i32, i32
  }
  func.func @transform_5(%arg0: i32) -> (i32, i32) {
    %c0_i32 = arith.constant 0 : i32
    %c0_i32_0 = arith.constant 0 : i32
    %c0_i32_1 = arith.constant 0 : i32
    return %c0_i32, %c0_i32_0 : i32, i32
  }
  func.func @transform_6(%arg0: i32) -> (i32, i32) {
    %c0_i32 = arith.constant 0 : i32
    %c0_i32_0 = arith.constant 0 : i32
    %c0_i32_1 = arith.constant 0 : i32
    return %c0_i32, %c0_i32_0 : i32, i32
  }
  func.func @transform_7(%arg0: i32) -> (i32, i32) {
    %c0_i32 = arith.constant 0 : i32
    %c0_i32_0 = arith.constant 0 : i32
    %c0_i32_1 = arith.constant 0 : i32
    return %c0_i32, %c0_i32_0 : i32, i32
  }
  func.func @transform_8(%arg0: i32) -> (i32, i32) {
    %c0_i32 = arith.constant 0 : i32
    %c0_i32_0 = arith.constant 0 : i32
    %c0_i32_1 = arith.constant 0 : i32
    return %c0_i32, %c0_i32_0 : i32, i32
  }
  func.func @transform_9(%arg0: i32) -> (i32, i32) {
    %c0_i32 = arith.constant 0 : i32
    %c0_i32_0 = arith.constant 0 : i32
    %c0_i32_1 = arith.constant 0 : i32
    return %c0_i32, %c0_i32_0 : i32, i32
  }
  func.func @transform_10(%arg0: i32) -> (i32, i32) {
    %c0_i32 = arith.constant 0 : i32
    %c0_i32_0 = arith.constant 0 : i32
    %c0_i32_1 = arith.constant 0 : i32
    return %c0_i32, %c0_i32_0 : i32, i32
  }
  func.func @transform_11(%arg0: i32) -> (i32, i32, i32) {
    %c0_i32 = arith.constant 0 : i32
    %c0_i32_0 = arith.constant 0 : i32
    %c0_i32_1 = arith.constant 0 : i32
    return %arg0, %c0_i32, %c0_i32_0 : i32, i32, i32
  }
  func.func @transform_12(%arg0: i32) -> (i32, i32, i32) {
    %c0_i32 = arith.constant 0 : i32
    %c0_i32_0 = arith.constant 0 : i32
    %c0_i32_1 = arith.constant 0 : i32
    return %arg0, %c0_i32, %c0_i32_0 : i32, i32, i32
  }
}

</mosaic_0001>

<llo_original>
// kernel: tpu_custom_call.1
$region0: #{tpu_custom_call.1}
  #allocation0 [shape = 'u32[]', space=smem, size = 0x4, offset = 0x4, fixed_abs, tag = 'smem constant byte address 0x4 - core index']
  #allocation1 [shape = 'u32[144,128]{1,0:T(1,128)}', space=vmem, size = 0x12000, scoped, tag = 'internal scratch']
  %s0 = inlined_call_operand.hbm [shape: bf16[256,128], index: 0, kind: input, shape index: {}]
  %s1 = inlined_call_operand.vmem [shape: f32[2,1,128], index: 1, kind: input, shape index: {}]
  %s2 = inlined_call_operand.hbm [shape: bf16[128,128], index: 2, kind: input, shape index: {}]
  %s3 = inlined_call_operand.vmem [shape: f32[1,128], index: 3, kind: input, shape index: {}]
  %s4 = inlined_call_operand.vmem [shape: f32[1,128], index: 4, kind: input, shape index: {}]
  %s5 = inlined_call_operand.vmem [shape: f32[1,128], index: 5, kind: input, shape index: {}]
  %s6 = inlined_call_operand.vmem [shape: bf16[8,128], index: 6, kind: input, shape index: {}]
  %s7 = inlined_call_operand.hbm [shape: bf16[128,128], index: 7, kind: input, shape index: {}]
  %s8 = inlined_call_operand.vmem [shape: f32[1,128], index: 8, kind: input, shape index: {}]
  %s9 = inlined_call_operand.hbm [shape: bf16[128,128], index: 9, kind: input, shape index: {}]
  %s10 = inlined_call_operand.vmem [shape: f32[1,128], index: 10, kind: input, shape index: {}]
  %s11 = inlined_call_operand.hbm [shape: f32[2,8,128], index: 11, kind: output, shape index: {0}]
  %s12 = inlined_call_operand.hbm [shape: f32[2,8,128], index: 12, kind: output, shape index: {1}]
  %13 = xla_tuple %s11, %s12
  %s14 = sld [smem:[#allocation0]]
  $region101: #{tpu_custom_call.1} parent=0
    _
  %s16 = ssub.s32 1, %s14
  %s17 = scalar_select 0, %s16, %s14
  $region1: #{tpu_custom_call.1} parent=0
    #allocation2 [shape = 'u8[65536]{0}', space=vmem, size = 0x10000, scoped, tag = 'input window, operand 0']
    #allocation3 [shape = 's32[2]{0}', space=sflag, size = 0x8, scoped, tag = 'scoped memory for tpu_custom_call.1']
    #allocation4 [shape = 's32[2]{0}', space=sflag, size = 0x8, scoped, tag = 'scoped memory for tpu_custom_call.1']
    #allocation5 [shape = 'u8[32768]{0}', space=vmem, size = 0x8000, scoped, tag = 'input window, operand 2, single buffered']
    #allocation6 [shape = 's32[1]{0}', space=sflag, size = 0x4, scoped, tag = 'scoped memory for tpu_custom_call.1']
    #allocation7 [shape = 'u8[32768]{0}', space=vmem, size = 0x8000, scoped, tag = 'input window, operand 7, single buffered']
    #allocation8 [shape = 'u8[32768]{0}', space=vmem, size = 0x8000, scoped, tag = 'input window, operand 9, single buffered']
    #allocation9 [shape = 's32[1]{0}', space=sflag, size = 0x4, scoped, tag = 'scoped memory for tpu_custom_call.1']
    #allocation10 [shape = 'u8[8192]{0}', space=vmem, size = 0x2000, scoped, tag = 'output window, operand 0']
    #allocation11 [shape = 'u8[8192]{0}', space=vmem, size = 0x2000, scoped, tag = 'output window, operand 1']
    #allocation12 [shape = 's32[2]{0}', space=sflag, size = 0x8, scoped, tag = 'scoped memory for tpu_custom_call.1']
    %18 = vsyncpa [#allocation3], 0
    %s19 = scalar_lea.sflag [#allocation3], 1
    %20 = vsyncpa %s19, 0
    %21 = vsyncpa [#allocation6], 0
    %22 = vsyncpa [#allocation9], 0
    %23 = vsyncpa [#allocation4], 0
    %s24 = scalar_lea.sflag [#allocation4], 1
    %25 = vsyncpa %s24, 0
    %26 = vsyncpa [#allocation12], 0
    %s27 = scalar_lea.sflag [#allocation12], 1
    %28 = vsyncpa %s27, 0
    loop: start=0, step=1, limit=4
    $region2: #{tpu_custom_call.1} parent=1 // loop_pre_header
      _
    $region3: #{tpu_custom_call.1} parent=1 // loop_header
      %s30 = sphi 0, %s34
      %p31 = scmp.ge.s32.totalorder %s30, 4
      %s40 = sphi 0, %s42
      %s43 = sphi 0, %s40
      %s44 = sphi 0, %s43
      %s60 = sphi 0, %s44
      %s66 = sphi 0, %s68
      %s69 = sphi 0, %s66
      %s70 = sphi 0, %s69
      %s86 = sphi 0, %s70
      %s90 = sphi 0, %s90
      %s92 = sphi 0, %s90
      %s93 = sphi 0, %s92
      %s107 = sphi 0, %s93
      %s111 = sphi 0, %s111
      %s113 = sphi 0, %s111
      %s114 = sphi 0, %s113
      %s128 = sphi 0, %s114
      %s132 = sphi 0, %s132
      %s134 = sphi 0, %s132
      %s135 = sphi 0, %s134
      %s149 = sphi 0, %s135
      %s153 = sphi 0, %s153
      %s155 = sphi 0, %s153
      %s156 = sphi 0, %s155
      %s170 = sphi 0, %s156
      %s174 = sphi 0, %s174
      %s176 = sphi 0, %s174
      %s177 = sphi 0, %s176
      %s191 = sphi 0, %s177
      %s195 = sphi 0, %s195
      %s197 = sphi 0, %s195
      %s198 = sphi 0, %s197
      %s212 = sphi 0, %s198
      %s216 = sphi 0, %s216
      %s218 = sphi 0, %s216
      %s219 = sphi 0, %s218
      %s233 = sphi 0, %s219
      %s237 = sphi 0, %s237
      %s239 = sphi 0, %s237
      %s240 = sphi 0, %s239
      %s254 = sphi 0, %s240
      %s258 = sphi 0, %s258
      %s260 = sphi 0, %s258
      %s261 = sphi 0, %s260
      %s275 = sphi 0, %s261
      %s281 = sphi 0, %s283
      %s284 = sphi 0, %s281
      %s285 = sphi 0, %s284
      %s301 = sphi 0, %s285
      %s307 = sphi 0, %s309
      %s310 = sphi 0, %s307
      %s311 = sphi 0, %s310
      %s327 = sphi 0, %s311
    $region4: #{tpu_custom_call.1} parent=1 // loop_header_branch
      %33 = sbr.rel (%p31) target = $region8
    $region5: #{tpu_custom_call.1} parent=1 // loop_body
      %s35 = ssub.s32 %s30, 1
      %s36 = ssub.s32 %s30, 2
      %s37 = sadd.s32 %s30, 1
      %s38 = ssub.s32 %s30, %s37
      %p39 = scmp.eq.s32.totalorder %s38, 0
      %s41 = sadd.s32 %s40, 1
      %s42 = scalar_select %p39, %s40, %s41
      %p45 = pneg %p39
      %p46 = scmp.eq.s32.totalorder %s30, 1
      %p47 = por %p45, %p46
      %p48 = scmp.ne.s32.totalorder %s40, %s43
      %p49 = scmp.eq.s32.totalorder %s30, 0
      %p50 = por %p48, %p49
      %p51 = scmp.ne.s32.totalorder %s40, %s43
      %p52 = scmp.eq.s32.totalorder %s35, 1
      %p53 = por %p51, %p52
      %p54 = scmp.ne.s32.totalorder %s43, %s44
      %p55 = scmp.eq.s32.totalorder %s35, 0
      %p56 = por %p54, %p55
      %p57 = scmp.ne.s32.totalorder %s43, %s44
      %p58 = scmp.eq.s32.totalorder %s36, 1
      %p59 = por %p57, %p58
      %p61 = scmp.ne.s32.totalorder %s44, %s60
      %p62 = scmp.eq.s32.totalorder %s36, 0
      %p63 = por %p61, %p62
      %s64 = ssub.s32 %s30, %s37
      %p65 = scmp.eq.s32.totalorder %s64, 0
      %s67 = sadd.s32 %s66, 1
      %s68 = scalar_select %p65, %s66, %s67
      %p71 = pneg %p65
      %p72 = scmp.eq.s32.totalorder %s30, 1
      %p73 = por %p71, %p72
      %p74 = scmp.ne.s32.totalorder %s66, %s69
      %p75 = scmp.eq.s32.totalorder %s30, 0
      %p76 = por %p74, %p75
      %p77 = scmp.ne.s32.totalorder %s66, %s69
      %p78 = scmp.eq.s32.totalorder %s35, 1
      %p79 = por %p77, %p78
      %p80 = scmp.ne.s32.totalorder %s69, %s70
      %p81 = scmp.eq.s32.totalorder %s35, 0
      %p82 = por %p80, %p81
      %p83 = scmp.ne.s32.totalorder %s69, %s70
      %p84 = scmp.eq.s32.totalorder %s36, 1
      %p85 = por %p83, %p84
      %p87 = scmp.ne.s32.totalorder %s70, %s86
      %p88 = scmp.eq.s32.totalorder %s36, 0
      %p89 = por %p87, %p88
      %s91 = sadd.s32 %s90, 1
      %p94 = scmp.eq.s32.totalorder %s30, 1
      %p95 = scmp.ne.s32.totalorder %s90, %s92
      %p96 = scmp.eq.s32.totalorder %s30, 0
      %p97 = por %p95, %p96
      %p98 = scmp.ne.s32.totalorder %s90, %s92
      %p99 = scmp.eq.s32.totalorder %s35, 1
      %p100 = por %p98, %p99
      %p101 = scmp.ne.s32.totalorder %s92, %s93
      %p102 = scmp.eq.s32.totalorder %s35, 0
      %p103 = por %p101, %p102
      %p104 = scmp.ne.s32.totalorder %s92, %s93
      %p105 = scmp.eq.s32.totalorder %s36, 1
      %p106 = por %p104, %p105
      %p108 = scmp.ne.s32.totalorder %s93, %s107
      %p109 = scmp.eq.s32.totalorder %s36, 0
      %p110 = por %p108, %p109
      %s112 = sadd.s32 %s111, 1
      %p115 = scmp.eq.s32.totalorder %s30, 1
      %p116 = scmp.ne.s32.totalorder %s111, %s113
      %p117 = scmp.eq.s32.totalorder %s30, 0
      %p118 = por %p116, %p117
      %p119 = scmp.ne.s32.totalorder %s111, %s113
      %p120 = scmp.eq.s32.totalorder %s35, 1
      %p121 = por %p119, %p120
      %p122 = scmp.ne.s32.totalorder %s113, %s114
      %p123 = scmp.eq.s32.totalorder %s35, 0
      %p124 = por %p122, %p123
      %p125 = scmp.ne.s32.totalorder %s113, %s114
      %p126 = scmp.eq.s32.totalorder %s36, 1
      %p127 = por %p125, %p126
      %p129 = scmp.ne.s32.totalorder %s114, %s128
      %p130 = scmp.eq.s32.totalorder %s36, 0
      %p131 = por %p129, %p130
      %s133 = sadd.s32 %s132, 1
      %p136 = scmp.eq.s32.totalorder %s30, 1
      %p137 = scmp.ne.s32.totalorder %s132, %s134
      %p138 = scmp.eq.s32.totalorder %s30, 0
      %p139 = por %p137, %p138
      %p140 = scmp.ne.s32.totalorder %s132, %s134
      %p141 = scmp.eq.s32.totalorder %s35, 1
      %p142 = por %p140, %p141
      %p143 = scmp.ne.s32.totalorder %s134, %s135
      %p144 = scmp.eq.s32.totalorder %s35, 0
      %p145 = por %p143, %p144
      %p146 = scmp.ne.s32.totalorder %s134, %s135
      %p147 = scmp.eq.s32.totalorder %s36, 1
      %p148 = por %p146, %p147
      %p150 = scmp.ne.s32.totalorder %s135, %s149
      %p151 = scmp.eq.s32.totalorder %s36, 0
      %p152 = por %p150, %p151
      %s154 = sadd.s32 %s153, 1
      %p157 = scmp.eq.s32.totalorder %s30, 1
      %p158 = scmp.ne.s32.totalorder %s153, %s155
      %p159 = scmp.eq.s32.totalorder %s30, 0
      %p160 = por %p158, %p159
      %p161 = scmp.ne.s32.totalorder %s153, %s155
      %p162 = scmp.eq.s32.totalorder %s35, 1
      %p163 = por %p161, %p162
      %p164 = scmp.ne.s32.totalorder %s155, %s156
      %p165 = scmp.eq.s32.totalorder %s35, 0
      %p166 = por %p164, %p165
      %p167 = scmp.ne.s32.totalorder %s155, %s156
      %p168 = scmp.eq.s32.totalorder %s36, 1
      %p169 = por %p167, %p168
      %p171 = scmp.ne.s32.totalorder %s156, %s170
      %p172 = scmp.eq.s32.totalorder %s36, 0
      %p173 = por %p171, %p172
      %s175 = sadd.s32 %s174, 1
      %p178 = scmp.eq.s32.totalorder %s30, 1
      %p179 = scmp.ne.s32.totalorder %s174, %s176
      %p180 = scmp.eq.s32.totalorder %s30, 0
      %p181 = por %p179, %p180
      %p182 = scmp.ne.s32.totalorder %s174, %s176
      %p183 = scmp.eq.s32.totalorder %s35, 1
      %p184 = por %p182, %p183
      %p185 = scmp.ne.s32.totalorder %s176, %s177
      %p186 = scmp.eq.s32.totalorder %s35, 0
      %p187 = por %p185, %p186
      %p188 = scmp.ne.s32.totalorder %s176, %s177
      %p189 = scmp.eq.s32.totalorder %s36, 1
      %p190 = por %p188, %p189
      %p192 = scmp.ne.s32.totalorder %s177, %s191
      %p193 = scmp.eq.s32.totalorder %s36, 0
      %p194 = por %p192, %p193
      %s196 = sadd.s32 %s195, 1
      %p199 = scmp.eq.s32.totalorder %s30, 1
      %p200 = scmp.ne.s32.totalorder %s195, %s197
      %p201 = scmp.eq.s32.totalorder %s30, 0
      %p202 = por %p200, %p201
      %p203 = scmp.ne.s32.totalorder %s195, %s197
      %p204 = scmp.eq.s32.totalorder %s35, 1
      %p205 = por %p203, %p204
      %p206 = scmp.ne.s32.totalorder %s197, %s198
      %p207 = scmp.eq.s32.totalorder %s35, 0
      %p208 = por %p206, %p207
      %p209 = scmp.ne.s32.totalorder %s197, %s198
      %p210 = scmp.eq.s32.totalorder %s36, 1
      %p211 = por %p209, %p210
      %p213 = scmp.ne.s32.totalorder %s198, %s212
      %p214 = scmp.eq.s32.totalorder %s36, 0
      %p215 = por %p213, %p214
      %s217 = sadd.s32 %s216, 1
      %p220 = scmp.eq.s32.totalorder %s30, 1
      %p221 = scmp.ne.s32.totalorder %s216, %s218
      %p222 = scmp.eq.s32.totalorder %s30, 0
      %p223 = por %p221, %p222
      %p224 = scmp.ne.s32.totalorder %s216, %s218
      %p225 = scmp.eq.s32.totalorder %s35, 1
      %p226 = por %p224, %p225
      %p227 = scmp.ne.s32.totalorder %s218, %s219
      %p228 = scmp.eq.s32.totalorder %s35, 0
      %p229 = por %p227, %p228
      %p230 = scmp.ne.s32.totalorder %s218, %s219
      %p231 = scmp.eq.s32.totalorder %s36, 1
      %p232 = por %p230, %p231
      %p234 = scmp.ne.s32.totalorder %s219, %s233
      %p235 = scmp.eq.s32.totalorder %s36, 0
      %p236 = por %p234, %p235
      %s238 = sadd.s32 %s237, 1
      %p241 = scmp.eq.s32.totalorder %s30, 1
      %p242 = scmp.ne.s32.totalorder %s237, %s239
      %p243 = scmp.eq.s32.totalorder %s30, 0
      %p244 = por %p242, %p243
      %p245 = scmp.ne.s32.totalorder %s237, %s239
      %p246 = scmp.eq.s32.totalorder %s35, 1
      %p247 = por %p245, %p246
      %p248 = scmp.ne.s32.totalorder %s239, %s240
      %p249 = scmp.eq.s32.totalorder %s35, 0
      %p250 = por %p248, %p249
      %p251 = scmp.ne.s32.totalorder %s239, %s240
      %p252 = scmp.eq.s32.totalorder %s36, 1
      %p253 = por %p251, %p252
      %p255 = scmp.ne.s32.totalorder %s240, %s254
      %p256 = scmp.eq.s32.totalorder %s36, 0
      %p257 = por %p255, %p256
      %s259 = sadd.s32 %s258, 1
      %p262 = scmp.eq.s32.totalorder %s30, 1
      %p263 = scmp.ne.s32.totalorder %s258, %s260
      %p264 = scmp.eq.s32.totalorder %s30, 0
      %p265 = por %p263, %p264
      %p266 = scmp.ne.s32.totalorder %s258, %s260
      %p267 = scmp.eq.s32.totalorder %s35, 1
      %p268 = por %p266, %p267
      %p269 = scmp.ne.s32.totalorder %s260, %s261
      %p270 = scmp.eq.s32.totalorder %s35, 0
      %p271 = por %p269, %p270
      %p272 = scmp.ne.s32.totalorder %s260, %s261
      %p273 = scmp.eq.s32.totalorder %s36, 1
      %p274 = por %p272, %p273
      %p276 = scmp.ne.s32.totalorder %s261, %s275
      %p277 = scmp.eq.s32.totalorder %s36, 0
      %p278 = por %p276, %p277
      %s279 = ssub.s32 %s30, %s37
      %p280 = scmp.eq.s32.totalorder %s279, 0
      %s282 = sadd.s32 %s281, 1
      %s283 = scalar_select %p280, %s281, %s282
      %p286 = pneg %p280
      %p287 = scmp.eq.s32.totalorder %s30, 1
      %p288 = por %p286, %p287
      %p289 = scmp.ne.s32.totalorder %s281, %s284
      %p290 = scmp.eq.s32.totalorder %s30, 0
      %p291 = por %p289, %p290
      %p292 = scmp.ne.s32.totalorder %s281, %s284
      %p293 = scmp.eq.s32.totalorder %s35, 1
      %p294 = por %p292, %p293
      %p295 = scmp.ne.s32.totalorder %s284, %s285
      %p296 = scmp.eq.s32.totalorder %s35, 0
      %p297 = por %p295, %p296
      %p298 = scmp.ne.s32.totalorder %s284, %s285
      %p299 = scmp.eq.s32.totalorder %s36, 1
      %p300 = por %p298, %p299
      %p302 = scmp.ne.s32.totalorder %s285, %s301
      %p303 = scmp.eq.s32.totalorder %s36, 0
      %p304 = por %p302, %p303
      %s305 = ssub.s32 %s30, %s37
      %p306 = scmp.eq.s32.totalorder %s305, 0
      %s308 = sadd.s32 %s307, 1
      %s309 = scalar_select %p306, %s307, %s308
      %p312 = pneg %p306
      %p313 = scmp.eq.s32.totalorder %s30, 1
      %p314 = por %p312, %p313
      %p315 = scmp.ne.s32.totalorder %s307, %s310
      %p316 = scmp.eq.s32.totalorder %s30, 0
      %p317 = por %p315, %p316
      %p318 = scmp.ne.s32.totalorder %s307, %s310
      %p319 = scmp.eq.s32.totalorder %s35, 1
      %p320 = por %p318, %p319
      %p321 = scmp.ne.s32.totalorder %s310, %s311
      %p322 = scmp.eq.s32.totalorder %s35, 0
      %p323 = por %p321, %p322
      %p324 = scmp.ne.s32.totalorder %s310, %s311
      %p325 = scmp.eq.s32.totalorder %s36, 1
      %p326 = por %p324, %p325
      %p328 = scmp.ne.s32.totalorder %s311, %s327
      %p329 = scmp.eq.s32.totalorder %s36, 0
      %p330 = por %p328, %p329
      %p331 = scmp.le.s32.totalorder 1, %s30
      %p332 = scmp.lt.s32.totalorder %s30, 3
      %p333 = pnand %p331, %p332
      %p334 = pneg %p333
      // Predicated region
      $region9: #{tpu_custom_call.1} parent=5 // pred_check
        _
      $region10: #{tpu_custom_call.1} parent=5 // pred_check_branch
        %336 = sbr.rel (%p333) target = $region12
      $region11: #{tpu_custom_call.1} parent=5 // pred_region
        %s337 = ssub.s32 %s30, 1
        // Predicated region
        $region13: #{tpu_custom_call.1} parent=11 // pred_check
          %p338 = pneg %p103
        $region14: #{tpu_custom_call.1} parent=11 // pred_check_branch
          %340 = sbr.rel (%p338) target = $region16
        $region15: #{tpu_custom_call.1} parent=11 // pred_region
          %s342 = ssub.s32 1024, 1024
          %343 = vsyncadd [#allocation6], %s342
          %s344 = sshll.u32 [#allocation5], 4
          %s345 = int_to_ptr.vmem [resolvable:$true] %s344
          %350 = dma.hbm_to_vmem [thread:$0]  %s2, 1024, %s345, [#allocation6], 64, 64, 4
        $region16: #{tpu_custom_call.1} parent=11 // pred_fallthru
          _
        // Predicated region
        $region17: #{tpu_custom_call.1} parent=11 // pred_check
          %p351 = pneg %p124
        $region18: #{tpu_custom_call.1} parent=11 // pred_check_branch
          %353 = sbr.rel (%p351) target = $region20
        $region19: #{tpu_custom_call.1} parent=11 // pred_region
          _
        $region20: #{tpu_custom_call.1} parent=11 // pred_fallthru
          _
        // Predicated region
        $region21: #{tpu_custom_call.1} parent=11 // pred_check
          %p354 = pneg %p145
        $region22: #{tpu_custom_call.1} parent=11 // pred_check_branch
          %356 = sbr.rel (%p354) target = $region24
        $region23: #{tpu_custom_call.1} parent=11 // pred_region
          _
        $region24: #{tpu_custom_call.1} parent=11 // pred_fallthru
          _
        // Predicated region
        $region25: #{tpu_custom_call.1} parent=11 // pred_check
          %p357 = pneg %p166
        $region26: #{tpu_custom_call.1} parent=11 // pred_check_branch
          %359 = sbr.rel (%p357) target = $region28
        $region27: #{tpu_custom_call.1} parent=11 // pred_region
          _
        $region28: #{tpu_custom_call.1} parent=11 // pred_fallthru
          _
        // Predicated region
        $region29: #{tpu_custom_call.1} parent=11 // pred_check
          %p360 = pneg %p187
        $region30: #{tpu_custom_call.1} parent=11 // pred_check_branch
          %362 = sbr.rel (%p360) target = $region32
        $region31: #{tpu_custom_call.1} parent=11 // pred_region
          _
        $region32: #{tpu_custom_call.1} parent=11 // pred_fallthru
          _
        // Predicated region
        $region33: #{tpu_custom_call.1} parent=11 // pred_check
          %p363 = pneg %p208
        $region34: #{tpu_custom_call.1} parent=11 // pred_check_branch
          %365 = sbr.rel (%p363) target = $region36
        $region35: #{tpu_custom_call.1} parent=11 // pred_region
          %s367 = ssub.s32 1024, 1024
          %368 = vsyncadd [#allocation6], %s367
          %s369 = sshll.u32 [#allocation7], 4
          %s370 = int_to_ptr.vmem [resolvable:$true] %s369
          %375 = dma.hbm_to_vmem [thread:$0]  %s7, 1024, %s370, [#allocation6], 64, 64, 4
        $region36: #{tpu_custom_call.1} parent=11 // pred_fallthru
          _
        // Predicated region
        $region37: #{tpu_custom_call.1} parent=11 // pred_check
          %p376 = pneg %p229
        $region38: #{tpu_custom_call.1} parent=11 // pred_check_branch
          %378 = sbr.rel (%p376) target = $region40
        $region39: #{tpu_custom_call.1} parent=11 // pred_region
          _
        $region40: #{tpu_custom_call.1} parent=11 // pred_fallthru
          _
        // Predicated region
        $region41: #{tpu_custom_call.1} parent=11 // pred_check
          %p379 = pneg %p250
        $region42: #{tpu_custom_call.1} parent=11 // pred_check_branch
          %381 = sbr.rel (%p379) target = $region44
        $region43: #{tpu_custom_call.1} parent=11 // pred_region
          %s383 = ssub.s32 1024, 1024
          %384 = vsyncadd [#allocation9], %s383
          %s385 = sshll.u32 [#allocation8], 4
          %s386 = int_to_ptr.vmem [resolvable:$true] %s385
          %391 = dma.hbm_to_vmem [thread:$0]  %s9, 1024, %s386, [#allocation9], 64, 64, 4
        $region44: #{tpu_custom_call.1} parent=11 // pred_fallthru
          _
        // Predicated region
        $region45: #{tpu_custom_call.1} parent=11 // pred_check
          %p392 = pneg %p271
        $region46: #{tpu_custom_call.1} parent=11 // pred_check_branch
          %394 = sbr.rel (%p392) target = $region48
        $region47: #{tpu_custom_call.1} parent=11 // pred_region
          _
        $region48: #{tpu_custom_call.1} parent=11 // pred_fallthru
          _
      $region12: #{tpu_custom_call.1} parent=5 // pred_fallthru
        _
      %p395 = scmp.lt.s32.totalorder %s30, 2
      // Predicated region
      $region49: #{tpu_custom_call.1} parent=5 // pred_check
        %p396 = pneg %p395
      $region50: #{tpu_custom_call.1} parent=5 // pred_check_branch
        %398 = sbr.rel (%p396) target = $region52
      $region51: #{tpu_custom_call.1} parent=5 // pred_region
        // Predicated region
        $region53: #{tpu_custom_call.1} parent=51 // pred_check
          %p399 = pneg %p50
        $region54: #{tpu_custom_call.1} parent=51 // pred_check_branch
          %401 = sbr.rel (%p399) target = $region56
        $region55: #{tpu_custom_call.1} parent=51 // pred_region
          %s402 = sand.u32 %s40, 1
          %s403 = scalar_lea.sflag [#allocation3], %s402
          %s404 = sand.u32 %s40, 1
          %s405 = smul.addr %s404, 64
          %s406 = scalar_lea.vmem [#allocation2], %s405
          %s407 = smul.u32 16, %s30
          %s409 = ssub.s32 1024, 1024
          %410 = vsyncadd %s403, %s409
          %s411 = smul.addr %s407, 64
          %s412 = scalar_lea.hbm %s0, %s411
          %s413 = sshll.u32 %s406, 4
          %s414 = int_to_ptr.vmem [resolvable:$true] %s413
          %419 = dma.hbm_to_vmem [thread:$0]  %s412, 1024, %s414, %s403, 64, 64, 4
        $region56: #{tpu_custom_call.1} parent=51 // pred_fallthru
          _
        // Predicated region
        $region57: #{tpu_custom_call.1} parent=51 // pred_check
          %p420 = pneg %p76
        $region58: #{tpu_custom_call.1} parent=51 // pred_check_branch
          %422 = sbr.rel (%p420) target = $region60
        $region59: #{tpu_custom_call.1} parent=51 // pred_region
          %p423 = scmp.lt.s32.totalorder %s30, 1
          %s424 = scalar_select %p423, %s30, 1
          %s425 = scalar_lea.vmem %s1, %s424
        $region60: #{tpu_custom_call.1} parent=51 // pred_fallthru
          _
      $region52: #{tpu_custom_call.1} parent=5 // pred_fallthru
        _
      %p426 = scmp.le.s32.totalorder 1, %s30
      %p427 = scmp.lt.s32.totalorder %s30, 3
      %p428 = pnand %p426, %p427
      %p429 = pneg %p428
      // Predicated region
      $region61: #{tpu_custom_call.1} parent=5 // pred_check
        _
      $region62: #{tpu_custom_call.1} parent=5 // pred_check_branch
        %431 = sbr.rel (%p428) target = $region64
      $region63: #{tpu_custom_call.1} parent=5 // pred_region
        %s432 = ssub.s32 %s30, 1
        %s433 = sand.u32 %s43, 1
        %s434 = scalar_lea.sflag [#allocation3], %s433
        %s435 = sand.u32 %s43, 1
        %s436 = smul.addr %s435, 64
        %s437 = scalar_lea.vmem [#allocation2], %s436
        // Predicated region
        $region65: #{tpu_custom_call.1} parent=63 // pred_check
          %p438 = pneg %p56
        $region66: #{tpu_custom_call.1} parent=63 // pred_check_branch
          %440 = sbr.rel (%p438) target = $region68
        $region67: #{tpu_custom_call.1} parent=63 // pred_region
          %441 = dma.done %s434, 1024
        $region68: #{tpu_custom_call.1} parent=63 // pred_fallthru
          _
        // Predicated region
        $region69: #{tpu_custom_call.1} parent=63 // pred_check
          %p442 = pneg %p103
        $region70: #{tpu_custom_call.1} parent=63 // pred_check_branch
          %444 = sbr.rel (%p442) target = $region72
        $region71: #{tpu_custom_call.1} parent=63 // pred_region
          %445 = dma.done [#allocation6], 1024
        $region72: #{tpu_custom_call.1} parent=63 // pred_fallthru
          _
        // Predicated region
        $region73: #{tpu_custom_call.1} parent=63 // pred_check
          %p446 = pneg %p208
        $region74: #{tpu_custom_call.1} parent=63 // pred_check_branch
          %448 = sbr.rel (%p446) target = $region76
        $region75: #{tpu_custom_call.1} parent=63 // pred_region
          %449 = dma.done [#allocation6], 1024
        $region76: #{tpu_custom_call.1} parent=63 // pred_fallthru
          _
        // Predicated region
        $region77: #{tpu_custom_call.1} parent=63 // pred_check
          %p450 = pneg %p250
        $region78: #{tpu_custom_call.1} parent=63 // pred_check_branch
          %452 = sbr.rel (%p450) target = $region80
        $region79: #{tpu_custom_call.1} parent=63 // pred_region
          %453 = dma.done [#allocation9], 1024
        $region80: #{tpu_custom_call.1} parent=63 // pred_fallthru
          _
        %s454 = sand.u32 %s43, 1
        %s455 = scalar_lea.sflag [#allocation3], %s454
        %s456 = sand.u32 %s43, 1
        %s457 = smul.addr %s456, 64
        %s458 = scalar_lea.vmem [#allocation2], %s457
        %p459 = pneg %p56
        %p460 = pneg %p53
        %p461 = scmp.lt.s32.totalorder %s35, 1
        %s462 = scalar_select %p461, %s35, 1
        %s463 = scalar_lea.vmem %s1, %s462
        %p464 = pneg %p82
        %p465 = pneg %p79
        %p466 = pneg %p103
        %p467 = pneg %p100
        %p468 = pneg %p124
        %p469 = pneg %p121
        %p470 = pneg %p145
        %p471 = pneg %p142
        %p472 = pneg %p166
        %p473 = pneg %p163
        %p474 = pneg %p187
        %p475 = pneg %p184
        %p476 = pneg %p208
        %p477 = pneg %p205
        %p478 = pneg %p229
        %p479 = pneg %p226
        %p480 = pneg %p250
        %p481 = pneg %p247
        %p482 = pneg %p271
        %p483 = pneg %p268
        %p484 = pneg %p297
        %p485 = pneg %p294
        %s486 = sand.u32 %s284, 1
        %s487 = scalar_lea.sflag [#allocation4], %s486
        %s488 = sand.u32 %s284, 1
        %s489 = smul.addr %s488, 8
        %s490 = scalar_lea.vmem [#allocation10], %s489
        %p491 = pneg %p323
        %p492 = pneg %p320
        %s493 = sand.u32 %s310, 1
        %s494 = scalar_lea.sflag [#allocation12], %s493
        %s495 = sand.u32 %s310, 1
        %s496 = smul.addr %s495, 8
        %s497 = scalar_lea.vmem [#allocation11], %s496
        %s498 = smul.u32 16, %s35
        %p499 = scmp.lt.s32.totalorder %s35, 1
        %s500 = scalar_select %p499, %s35, 1
        %s501 = scalar_lea.vmem %s1, %s500
        %v503 = vld [vmem:[%s437] sm:$0xf]
        %v504 = vld [vmem:[%s437 + $0x4] sm:$0xf]
        %v505 = vld [vmem:[%s437 + $0x8] sm:$0xf]
        %v506 = vld [vmem:[%s437 + $0xc] sm:$0xf]
        %v507 = vld [vmem:[%s437 + $0x10] sm:$0xf]
        %v508 = vld [vmem:[%s437 + $0x14] sm:$0xf]
        %v509 = vld [vmem:[%s437 + $0x18] sm:$0xf]
        %v510 = vld [vmem:[%s437 + $0x1c] sm:$0xf]
        %v511 = vld [vmem:[%s437 + $0x20] sm:$0xf]
        %v512 = vld [vmem:[%s437 + $0x24] sm:$0xf]
        %v513 = vld [vmem:[%s437 + $0x28] sm:$0xf]
        %v514 = vld [vmem:[%s437 + $0x2c] sm:$0xf]
        %v515 = vld [vmem:[%s437 + $0x30] sm:$0xf]
        %v516 = vld [vmem:[%s437 + $0x34] sm:$0xf]
        %v517 = vld [vmem:[%s437 + $0x38] sm:$0xf]
        %v518 = vld [vmem:[%s437 + $0x3c] sm:$0xf]
        %v519 = vld [vmem:[#allocation5] sm:$0xf]
        %v520 = vld [vmem:[#allocation5 + $0x4] sm:$0xf]
        %v521 = vld [vmem:[#allocation5 + $0x8] sm:$0xf]
        %v522 = vld [vmem:[#allocation5 + $0xc] sm:$0xf]
        %v523 = vld [vmem:[#allocation5 + $0x10] sm:$0xf]
        %v524 = vld [vmem:[#allocation5 + $0x14] sm:$0xf]
        %v525 = vld [vmem:[#allocation5 + $0x18] sm:$0xf]
        %v526 = vld [vmem:[#allocation5 + $0x1c] sm:$0xf]
        %v527 = vld [vmem:[#allocation5 + $0x20] sm:$0xf]
        %v528 = vld [vmem:[#allocation5 + $0x24] sm:$0xf]
        %v529 = vld [vmem:[#allocation5 + $0x28] sm:$0xf]
        %v530 = vld [vmem:[#allocation5 + $0x2c] sm:$0xf]
        %v531 = vld [vmem:[#allocation5 + $0x30] sm:$0xf]
        %v532 = vld [vmem:[#allocation5 + $0x34] sm:$0xf]
        %v533 = vld [vmem:[#allocation5 + $0x38] sm:$0xf]
        %v534 = vld [vmem:[#allocation5 + $0x3c] sm:$0xf]
        %v535 = vld [vmem:[%s3] sm:$0x1]
        %v537 = vlaneseq
        %v538 = vshrl.u32 %v537, 7
        %v539 = vsub.s32 0, %v538
        %v540 = vrot.slane %v535, %v539
        %v558 = vunpack.c.l.b16 %v503
        %v559 = vunpack.c.l.b16 %v504
        %v560 = vunpack.c.l.b16 %v505
        %v561 = vunpack.c.l.b16 %v506
        %v562 = vunpack.c.l.b16 %v507
        %v563 = vunpack.c.l.b16 %v508
        %v564 = vunpack.c.l.b16 %v509
        %v565 = vunpack.c.l.b16 %v510
        %v566 = vunpack.c.l.b16 %v511
        %v567 = vunpack.c.l.b16 %v512
        %v568 = vunpack.c.l.b16 %v513
        %v569 = vunpack.c.l.b16 %v514
        %v570 = vunpack.c.l.b16 %v515
        %v571 = vunpack.c.l.b16 %v516
        %v572 = vunpack.c.l.b16 %v517
        %v573 = vunpack.c.l.b16 %v518
        %v574 = vpack.c.b16 %v559, %v558
        %v575 = vpack.c.b16 %v561, %v560
        %v576 = vpack.c.b16 %v563, %v562
        %v577 = vpack.c.b16 %v565, %v564
        %v578 = vpack.c.b16 %v567, %v566
        %v579 = vpack.c.b16 %v569, %v568
        %v580 = vpack.c.b16 %v571, %v570
        %v581 = vpack.c.b16 %v573, %v572
        %v606 = vunpack.c.l.b16 %v519
        %v607 = vunpack.c.l.b16 %v520
        %v608 = vunpack.c.l.b16 %v521
        %v609 = vunpack.c.l.b16 %v522
        %v610 = vunpack.c.l.b16 %v523
        %v611 = vunpack.c.l.b16 %v524
        %v612 = vunpack.c.l.b16 %v525
        %v613 = vunpack.c.l.b16 %v526
        %v614 = vunpack.c.l.b16 %v527
        %v615 = vunpack.c.l.b16 %v528
        %v616 = vunpack.c.l.b16 %v529
        %v617 = vunpack.c.l.b16 %v530
        %v618 = vunpack.c.l.b16 %v531
        %v619 = vunpack.c.l.b16 %v532
        %v620 = vunpack.c.l.b16 %v533
        %v621 = vunpack.c.l.b16 %v534
        %v622 = vpack.c.b16 %v607, %v606
        %v623 = vpack.c.b16 %v609, %v608
        %v624 = vpack.c.b16 %v611, %v610
        %v625 = vpack.c.b16 %v613, %v612
        %v626 = vpack.c.b16 %v615, %v614
        %v627 = vpack.c.b16 %v617, %v616
        %v628 = vpack.c.b16 %v619, %v618
        %v629 = vpack.c.b16 %v621, %v620
        %638 = vmatprep.subr.bf16.mxu0 0
        %639 = vmatpush1.bf16.msra.mxu0 %v622
        %640 = vmatprep.subr.bf16.mxu0 0
        %641 = vmatpush1.bf16.msra.mxu0 %v623
        %642 = vmatprep.subr.bf16.mxu0 0
        %643 = vmatpush1.bf16.msra.mxu0 %v624
        %644 = vmatprep.subr.bf16.mxu0 0
        %645 = vmatpush1.bf16.msra.mxu0 %v625
        %646 = vmatprep.subr.bf16.mxu0 0
        %647 = vmatpush1.bf16.msra.mxu0 %v626
        %648 = vmatprep.subr.bf16.mxu0 0
        %649 = vmatpush1.bf16.msra.mxu0 %v627
        %650 = vmatprep.subr.bf16.mxu0 0
        %651 = vmatpush1.bf16.msra.mxu0 %v628
        %652 = vmatprep.subr.bf16.mxu0 0
        %653 = vmatpush1.bf16.msra.mxu0 %v629
        %654 = vmatprep.subr.bf16.mxu0 0
        %655 = vmatpush1.bf16.msra.mxu0 0
        %656 = vmatprep.subr.bf16.mxu0 0
        %657 = vmatpush1.bf16.msra.mxu0 0
        %658 = vmatprep.subr.bf16.mxu0 0
        %659 = vmatpush1.bf16.msra.mxu0 0
        %660 = vmatprep.subr.bf16.mxu0 0
        %661 = vmatpush1.bf16.msra.mxu0 0
        %662 = vmatprep.subr.bf16.mxu0 0
        %663 = vmatpush1.bf16.msra.mxu0 0
        %664 = vmatprep.subr.bf16.mxu0 0
        %665 = vmatpush1.bf16.msra.mxu0 0
        %666 = vmatprep.subr.bf16.mxu0 0
        %667 = vmatpush1.bf16.msra.mxu0 0
        %668 = vmatprep.subr.bf16.mxu0 0
        %669 = vmatpush1.bf16.msra.mxu0 0
        %670 = vmatprep.mubr.bf16.mxu0 0
        %671 = vmatmul.mubr.bf16.gmra.mrb[0].mxu0 %v574
        %v672 = vpop.f32.mrb[0].mxu0
        %v673 = vadd.f32 %v540, %v672
        %v674 = vpop.f32.mrb[0].mxu0
        %v675 = vpop.f32.mrb[0].mxu0
        %v676 = vadd.f32 %v540, %v675
        %v677 = vpop.f32.mrb[0].mxu0
        %678 = vmatprep.mubr.bf16.mxu0 0
        %679 = vmatmul.mubr.bf16.gmra.mrb[0].mxu0 %v575
        %v680 = vpop.f32.mrb[0].mxu0
        %v681 = vadd.f32 %v540, %v680
        %v682 = vpop.f32.mrb[0].mxu0
        %v683 = vpop.f32.mrb[0].mxu0
        %v684 = vadd.f32 %v540, %v683
        %v685 = vpop.f32.mrb[0].mxu0
        %686 = vmatprep.mubr.bf16.mxu0 0
        %687 = vmatmul.mubr.bf16.gmra.mrb[0].mxu0 %v576
        %v688 = vpop.f32.mrb[0].mxu0
        %v689 = vadd.f32 %v540, %v688
        %v690 = vpop.f32.mrb[0].mxu0
        %v691 = vpop.f32.mrb[0].mxu0
        %v692 = vadd.f32 %v540, %v691
        %v693 = vpop.f32.mrb[0].mxu0
        %694 = vmatprep.mubr.bf16.mxu0 0
        %695 = vmatmul.mubr.bf16.gmra.mrb[0].mxu0 %v577
        %v696 = vpop.f32.mrb[0].mxu0
        %v697 = vadd.f32 %v540, %v696
        %v698 = vpop.f32.mrb[0].mxu0
        %v699 = vpop.f32.mrb[0].mxu0
        %v700 = vadd.f32 %v540, %v699
        %v701 = vpop.f32.mrb[0].mxu0
        %702 = vmatprep.mubr.bf16.mxu0 0
        %703 = vmatmul.mubr.bf16.gmra.mrb[0].mxu0 %v578
        %v704 = vpop.f32.mrb[0].mxu0
        %v705 = vadd.f32 %v540, %v704
        %v706 = vpop.f32.mrb[0].mxu0
        %v707 = vpop.f32.mrb[0].mxu0
        %v708 = vadd.f32 %v540, %v707
        %v709 = vpop.f32.mrb[0].mxu0
        %710 = vmatprep.mubr.bf16.mxu0 0
        %711 = vmatmul.mubr.bf16.gmra.mrb[0].mxu0 %v579
        %v712 = vpop.f32.mrb[0].mxu0
        %v713 = vadd.f32 %v540, %v712
        %v714 = vpop.f32.mrb[0].mxu0
        %v715 = vpop.f32.mrb[0].mxu0
        %v716 = vadd.f32 %v540, %v715
        %v717 = vpop.f32.mrb[0].mxu0
        %718 = vmatprep.mubr.bf16.mxu0 0
        %719 = vmatmul.mubr.bf16.gmra.mrb[0].mxu0 %v580
        %v720 = vpop.f32.mrb[0].mxu0
        %v721 = vadd.f32 %v540, %v720
        %v722 = vpop.f32.mrb[0].mxu0
        %v723 = vpop.f32.mrb[0].mxu0
        %v724 = vadd.f32 %v540, %v723
        %v725 = vpop.f32.mrb[0].mxu0
        %726 = vmatprep.mubr.bf16.mxu0 0
        %727 = vmatmul.mubr.bf16.gmra.mrb[0].mxu0 %v581
        %v728 = vpop.f32.mrb[0].mxu0
        %v729 = vadd.f32 %v540, %v728
        %v730 = vpop.f32.mrb[0].mxu0
        %v731 = vpop.f32.mrb[0].mxu0
        %v732 = vadd.f32 %v540, %v731
        %v733 = vpop.f32.mrb[0].mxu0
        %734 = vdwg.mxu0
        %735 = vadd.xlane.f32.xlu0 %v673
        %v736 = vpop.xlane.xlu0 %735
        %737 = vadd.xlane.f32.xlu0 %v676
        %v738 = vpop.xlane.xlu0 %737
        %739 = vadd.xlane.f32.xlu0 %v681
        %v740 = vpop.xlane.xlu0 %739
        %741 = vadd.xlane.f32.xlu0 %v684
        %v742 = vpop.xlane.xlu0 %741
        %743 = vadd.xlane.f32.xlu0 %v689
        %v744 = vpop.xlane.xlu0 %743
        %745 = vadd.xlane.f32.xlu0 %v692
        %v746 = vpop.xlane.xlu0 %745
        %747 = vadd.xlane.f32.xlu0 %v697
        %v748 = vpop.xlane.xlu0 %747
        %749 = vadd.xlane.f32.xlu0 %v700
        %v750 = vpop.xlane.xlu0 %749
        %751 = vadd.xlane.f32.xlu0 %v705
        %v752 = vpop.xlane.xlu0 %751
        %753 = vadd.xlane.f32.xlu0 %v708
        %v754 = vpop.xlane.xlu0 %753
        %755 = vadd.xlane.f32.xlu0 %v713
        %v756 = vpop.xlane.xlu0 %755
        %757 = vadd.xlane.f32.xlu0 %v716
        %v758 = vpop.xlane.xlu0 %757
        %759 = vadd.xlane.f32.xlu0 %v721
        %v760 = vpop.xlane.xlu0 %759
        %761 = vadd.xlane.f32.xlu0 %v724
        %v762 = vpop.xlane.xlu0 %761
        %763 = vadd.xlane.f32.xlu0 %v729
        %v764 = vpop.xlane.xlu0 %763
        %765 = vadd.xlane.f32.xlu0 %v732
        %v766 = vpop.xlane.xlu0 %765
        %v767 = vrcp.pop 128.0
        %v768 = vmul.f32 %v736, %v767
        %v769 = vmul.f32 %v738, %v767
        %v770 = vmul.f32 %v740, %v767
        %v771 = vmul.f32 %v742, %v767
        %v772 = vmul.f32 %v744, %v767
        %v773 = vmul.f32 %v746, %v767
        %v774 = vmul.f32 %v748, %v767
        %v775 = vmul.f32 %v750, %v767
        %v776 = vmul.f32 %v752, %v767
        %v777 = vmul.f32 %v754, %v767
        %v778 = vmul.f32 %v756, %v767
        %v779 = vmul.f32 %v758, %v767
        %v780 = vmul.f32 %v760, %v767
        %v781 = vmul.f32 %v762, %v767
        %v782 = vmul.f32 %v764, %v767
        %v783 = vmul.f32 %v766, %v767
        %v784 = vmul.f32 %v673, %v673
        %v785 = vmul.f32 %v676, %v676
        %v786 = vmul.f32 %v681, %v681
        %v787 = vmul.f32 %v684, %v684
        %v788 = vmul.f32 %v689, %v689
        %v789 = vmul.f32 %v692, %v692
        %v790 = vmul.f32 %v697, %v697
        %v791 = vmul.f32 %v700, %v700
        %v792 = vmul.f32 %v705, %v705
        %v793 = vmul.f32 %v708, %v708
        %v794 = vmul.f32 %v713, %v713
        %v795 = vmul.f32 %v716, %v716
        %v796 = vmul.f32 %v721, %v721
        %v797 = vmul.f32 %v724, %v724
        %v798 = vmul.f32 %v729, %v729
        %v799 = vmul.f32 %v732, %v732
        %800 = vadd.xlane.f32.xlu0 %v784
        %v801 = vpop.xlane.xlu0 %800
        %802 = vadd.xlane.f32.xlu0 %v785
        %v803 = vpop.xlane.xlu0 %802
        %804 = vadd.xlane.f32.xlu0 %v786
        %v805 = vpop.xlane.xlu0 %804
        %806 = vadd.xlane.f32.xlu0 %v787
        %v807 = vpop.xlane.xlu0 %806
        %808 = vadd.xlane.f32.xlu0 %v788
        %v809 = vpop.xlane.xlu0 %808
        %810 = vadd.xlane.f32.xlu0 %v789
        %v811 = vpop.xlane.xlu0 %810
        %812 = vadd.xlane.f32.xlu0 %v790
        %v813 = vpop.xlane.xlu0 %812
        %814 = vadd.xlane.f32.xlu0 %v791
        %v815 = vpop.xlane.xlu0 %814
        %816 = vadd.xlane.f32.xlu0 %v792
        %v817 = vpop.xlane.xlu0 %816
        %818 = vadd.xlane.f32.xlu0 %v793
        %v819 = vpop.xlane.xlu0 %818
        %820 = vadd.xlane.f32.xlu0 %v794
        %v821 = vpop.xlane.xlu0 %820
        %822 = vadd.xlane.f32.xlu0 %v795
        %v823 = vpop.xlane.xlu0 %822
        %824 = vadd.xlane.f32.xlu0 %v796
        %v825 = vpop.xlane.xlu0 %824
        %826 = vadd.xlane.f32.xlu0 %v797
        %v827 = vpop.xlane.xlu0 %826
        %828 = vadd.xlane.f32.xlu0 %v798
        %v829 = vpop.xlane.xlu0 %828
        %830 = vadd.xlane.f32.xlu0 %v799
        %v831 = vpop.xlane.xlu0 %830
        %v832 = vmul.f32 %v801, %v767
        %v833 = vmul.f32 %v803, %v767
        %v834 = vmul.f32 %v805, %v767
        %v835 = vmul.f32 %v807, %v767
        %v836 = vmul.f32 %v809, %v767
        %v837 = vmul.f32 %v811, %v767
        %v838 = vmul.f32 %v813, %v767
        %v839 = vmul.f32 %v815, %v767
        %v840 = vmul.f32 %v817, %v767
        %v841 = vmul.f32 %v819, %v767
        %v842 = vmul.f32 %v821, %v767
        %v843 = vmul.f32 %v823, %v767
        %v844 = vmul.f32 %v825, %v767
        %v845 = vmul.f32 %v827, %v767
        %v846 = vmul.f32 %v829, %v767
        %v847 = vmul.f32 %v831, %v767
        %v848 = vmul.f32 %v768, %v768
        %v849 = vmul.f32 %v769, %v769
        %v850 = vmul.f32 %v770, %v770
        %v851 = vmul.f32 %v771, %v771
        %v852 = vmul.f32 %v772, %v772
        %v853 = vmul.f32 %v773, %v773
        %v854 = vmul.f32 %v774, %v774
        %v855 = vmul.f32 %v775, %v775
        %v856 = vmul.f32 %v776, %v776
        %v857 = vmul.f32 %v777, %v777
        %v858 = vmul.f32 %v778, %v778
        %v859 = vmul.f32 %v779, %v779
        %v860 = vmul.f32 %v780, %v780
        %v861 = vmul.f32 %v781, %v781
        %v862 = vmul.f32 %v782, %v782
        %v863 = vmul.f32 %v783, %v783
        %v864 = vsub.f32 %v832, %v848
        %v865 = vsub.f32 %v833, %v849
        %v866 = vsub.f32 %v834, %v850
        %v867 = vsub.f32 %v835, %v851
        %v868 = vsub.f32 %v836, %v852
        %v869 = vsub.f32 %v837, %v853
        %v870 = vsub.f32 %v838, %v854
        %v871 = vsub.f32 %v839, %v855
        %v872 = vsub.f32 %v840, %v856
        %v873 = vsub.f32 %v841, %v857
        %v874 = vsub.f32 %v842, %v858
        %v875 = vsub.f32 %v843, %v859
        %v876 = vsub.f32 %v844, %v860
        %v877 = vsub.f32 %v845, %v861
        %v878 = vsub.f32 %v846, %v862
        %v879 = vsub.f32 %v847, %v863
        %v880 = vsub.f32 %v673, %v768
        %v881 = vsub.f32 %v676, %v769
        %v882 = vsub.f32 %v681, %v770
        %v883 = vsub.f32 %v684, %v771
        %v884 = vsub.f32 %v689, %v772
        %v885 = vsub.f32 %v692, %v773
        %v886 = vsub.f32 %v697, %v774
        %v887 = vsub.f32 %v700, %v775
        %v888 = vsub.f32 %v705, %v776
        %v889 = vsub.f32 %v708, %v777
        %v890 = vsub.f32 %v713, %v778
        %v891 = vsub.f32 %v716, %v779
        %v892 = vsub.f32 %v721, %v780
        %v893 = vsub.f32 %v724, %v781
        %v894 = vsub.f32 %v729, %v782
        %v895 = vsub.f32 %v732, %v783
        %v896 = vadd.f32 %v864, 1e-05
        %v897 = vadd.f32 %v865, 1e-05
        %v898 = vadd.f32 %v866, 1e-05
        %v899 = vadd.f32 %v867, 1e-05
        %v900 = vadd.f32 %v868, 1e-05
        %v901 = vadd.f32 %v869, 1e-05
        %v902 = vadd.f32 %v870, 1e-05
        %v903 = vadd.f32 %v871, 1e-05
        %v904 = vadd.f32 %v872, 1e-05
        %v905 = vadd.f32 %v873, 1e-05
        %v906 = vadd.f32 %v874, 1e-05
        %v907 = vadd.f32 %v875, 1e-05
        %v908 = vadd.f32 %v876, 1e-05
        %v909 = vadd.f32 %v877, 1e-05
        %v910 = vadd.f32 %v878, 1e-05
        %v911 = vadd.f32 %v879, 1e-05
        %v912 = vrsqrt.pop %v896
        %v913 = vrsqrt.pop %v897
        %v914 = vrsqrt.pop %v898
        %v915 = vrsqrt.pop %v899
        %v916 = vrsqrt.pop %v900
        %v917 = vrsqrt.pop %v901
        %v918 = vrsqrt.pop %v902
        %v919 = vrsqrt.pop %v903
        %v920 = vrsqrt.pop %v904
        %v921 = vrsqrt.pop %v905
        %v922 = vrsqrt.pop %v906
        %v923 = vrsqrt.pop %v907
        %v924 = vrsqrt.pop %v908
        %v925 = vrsqrt.pop %v909
        %v926 = vrsqrt.pop %v910
        %v927 = vrsqrt.pop %v911
        %v928 = vmul.f32 %v880, %v912
        %v929 = vmul.f32 %v881, %v913
        %v930 = vmul.f32 %v882, %v914
        %v931 = vmul.f32 %v883, %v915
        %v932 = vmul.f32 %v884, %v916
        %v933 = vmul.f32 %v885, %v917
        %v934 = vmul.f32 %v886, %v918
        %v935 = vmul.f32 %v887, %v919
        %v936 = vmul.f32 %v888, %v920
        %v937 = vmul.f32 %v889, %v921
        %v938 = vmul.f32 %v890, %v922
        %v939 = vmul.f32 %v891, %v923
        %v940 = vmul.f32 %v892, %v924
        %v941 = vmul.f32 %v893, %v925
        %v942 = vmul.f32 %v894, %v926
        %v943 = vmul.f32 %v895, %v927
        %v944 = vld [vmem:[%s4] sm:$0x1]
        %v946 = vlaneseq
        %v947 = vshrl.u32 %v946, 7
        %v948 = vsub.s32 0, %v947
        %v949 = vrot.slane %v944, %v948
        %v951 = vmul.f32 %v928, %v949
        %v952 = vmul.f32 %v929, %v949
        %v953 = vmul.f32 %v930, %v949
        %v954 = vmul.f32 %v931, %v949
        %v955 = vmul.f32 %v932, %v949
        %v956 = vmul.f32 %v933, %v949
        %v957 = vmul.f32 %v934, %v949
        %v958 = vmul.f32 %v935, %v949
        %v959 = vmul.f32 %v936, %v949
        %v960 = vmul.f32 %v937, %v949
        %v961 = vmul.f32 %v938, %v949
        %v962 = vmul.f32 %v939, %v949
        %v963 = vmul.f32 %v940, %v949
        %v964 = vmul.f32 %v941, %v949
        %v965 = vmul.f32 %v942, %v949
        %v966 = vmul.f32 %v943, %v949
        %v967 = vld [vmem:[%s5] sm:$0x1]
        %v969 = vlaneseq
        %v970 = vshrl.u32 %v969, 7
        %v971 = vsub.s32 0, %v970
        %v972 = vrot.slane %v967, %v971
        %v974 = vadd.f32 %v951, %v972
        %v975 = vadd.f32 %v952, %v972
        %v976 = vadd.f32 %v953, %v972
        %v977 = vadd.f32 %v954, %v972
        %v978 = vadd.f32 %v955, %v972
        %v979 = vadd.f32 %v956, %v972
        %v980 = vadd.f32 %v957, %v972
        %v981 = vadd.f32 %v958, %v972
        %v982 = vadd.f32 %v959, %v972
        %v983 = vadd.f32 %v960, %v972
        %v984 = vadd.f32 %v961, %v972
        %v985 = vadd.f32 %v962, %v972
        %v986 = vadd.f32 %v963, %v972
        %v987 = vadd.f32 %v964, %v972
        %v988 = vadd.f32 %v965, %v972
        %v989 = vadd.f32 %v966, %v972
        %v990 = vpack.c.bf16 %v975, %v974
        %v991 = vpack.c.bf16 %v977, %v976
        %v992 = vpack.c.bf16 %v979, %v978
        %v993 = vpack.c.bf16 %v981, %v980
        %v994 = vpack.c.bf16 %v983, %v982
        %v995 = vpack.c.bf16 %v985, %v984
        %v996 = vpack.c.bf16 %v987, %v986
        %v997 = vpack.c.bf16 %v989, %v988
        %v998 = vld [vmem:[#allocation7] sm:$0xf]
        %v999 = vld [vmem:[#allocation7 + $0x4] sm:$0xf]
        %v1000 = vld [vmem:[#allocation7 + $0x8] sm:$0xf]
        %v1001 = vld [vmem:[#allocation7 + $0xc] sm:$0xf]
        %v1002 = vld [vmem:[#allocation7 + $0x10] sm:$0xf]
        %v1003 = vld [vmem:[#allocation7 + $0x14] sm:$0xf]
        %v1004 = vld [vmem:[#allocation7 + $0x18] sm:$0xf]
        %v1005 = vld [vmem:[#allocation7 + $0x1c] sm:$0xf]
        %v1006 = vld [vmem:[#allocation7 + $0x20] sm:$0xf]
        %v1007 = vld [vmem:[#allocation7 + $0x24] sm:$0xf]
        %v1008 = vld [vmem:[#allocation7 + $0x28] sm:$0xf]
        %v1009 = vld [vmem:[#allocation7 + $0x2c] sm:$0xf]
        %v1010 = vld [vmem:[#allocation7 + $0x30] sm:$0xf]
        %v1011 = vld [vmem:[#allocation7 + $0x34] sm:$0xf]
        %v1012 = vld [vmem:[#allocation7 + $0x38] sm:$0xf]
        %v1013 = vld [vmem:[#allocation7 + $0x3c] sm:$0xf]
        %v1014 = vld [vmem:[%s8] sm:$0x1]
        %v1016 = vlaneseq
        %v1017 = vshrl.u32 %v1016, 7
        %v1018 = vsub.s32 0, %v1017
        %v1019 = vrot.slane %v1014, %v1018
        %v1037 = vunpack.c.l.b16 %v998
        %v1038 = vunpack.c.l.b16 %v999
        %v1039 = vunpack.c.l.b16 %v1000
        %v1040 = vunpack.c.l.b16 %v1001
        %v1041 = vunpack.c.l.b16 %v1002
        %v1042 = vunpack.c.l.b16 %v1003
        %v1043 = vunpack.c.l.b16 %v1004
        %v1044 = vunpack.c.l.b16 %v1005
        %v1045 = vunpack.c.l.b16 %v1006
        %v1046 = vunpack.c.l.b16 %v1007
        %v1047 = vunpack.c.l.b16 %v1008
        %v1048 = vunpack.c.l.b16 %v1009
        %v1049 = vunpack.c.l.b16 %v1010
        %v1050 = vunpack.c.l.b16 %v1011
        %v1051 = vunpack.c.l.b16 %v1012
        %v1052 = vunpack.c.l.b16 %v1013
        %v1053 = vpack.c.b16 %v1038, %v1037
        %v1054 = vpack.c.b16 %v1040, %v1039
        %v1055 = vpack.c.b16 %v1042, %v1041
        %v1056 = vpack.c.b16 %v1044, %v1043
        %v1057 = vpack.c.b16 %v1046, %v1045
        %v1058 = vpack.c.b16 %v1048, %v1047
        %v1059 = vpack.c.b16 %v1050, %v1049
        %v1060 = vpack.c.b16 %v1052, %v1051
        %1069 = vmatprep.subr.bf16.mxu0 0
        %1070 = vmatpush1.bf16.msra.mxu0 %v1053
        %1071 = vmatprep.subr.bf16.mxu0 0
        %1072 = vmatpush1.bf16.msra.mxu0 %v1054
        %1073 = vmatprep.subr.bf16.mxu0 0
        %1074 = vmatpush1.bf16.msra.mxu0 %v1055
        %1075 = vmatprep.subr.bf16.mxu0 0
        %1076 = vmatpush1.bf16.msra.mxu0 %v1056
        %1077 = vmatprep.subr.bf16.mxu0 0
        %1078 = vmatpush1.bf16.msra.mxu0 %v1057
        %1079 = vmatprep.subr.bf16.mxu0 0
        %1080 = vmatpush1.bf16.msra.mxu0 %v1058
        %1081 = vmatprep.subr.bf16.mxu0 0
        %1082 = vmatpush1.bf16.msra.mxu0 %v1059
        %1083 = vmatprep.subr.bf16.mxu0 0
        %1084 = vmatpush1.bf16.msra.mxu0 %v1060
        %1085 = vmatprep.subr.bf16.mxu0 0
        %1086 = vmatpush1.bf16.msra.mxu0 0
        %1087 = vmatprep.subr.bf16.mxu0 0
        %1088 = vmatpush1.bf16.msra.mxu0 0
        %1089 = vmatprep.subr.bf16.mxu0 0
        %1090 = vmatpush1.bf16.msra.mxu0 0
        %1091 = vmatprep.subr.bf16.mxu0 0
        %1092 = vmatpush1.bf16.msra.mxu0 0
        %1093 = vmatprep.subr.bf16.mxu0 0
        %1094 = vmatpush1.bf16.msra.mxu0 0
        %1095 = vmatprep.subr.bf16.mxu0 0
        %1096 = vmatpush1.bf16.msra.mxu0 0
        %1097 = vmatprep.subr.bf16.mxu0 0
        %1098 = vmatpush1.bf16.msra.mxu0 0
        %1099 = vmatprep.subr.bf16.mxu0 0
        %1100 = vmatpush1.bf16.msra.mxu0 0
        %1101 = vmatprep.mubr.bf16.mxu0 0
        %1102 = vmatmul.mubr.bf16.gmra.mrb[0].mxu0 %v990
        %v1103 = vpop.f32.mrb[0].mxu0
        %v1104 = vadd.f32 %v1019, %v1103
        %v1105 = vpop.f32.mrb[0].mxu0
        %v1106 = vpop.f32.mrb[0].mxu0
        %v1107 = vadd.f32 %v1019, %v1106
        %v1108 = vpop.f32.mrb[0].mxu0
        %1109 = vmatprep.mubr.bf16.mxu0 0
        %1110 = vmatmul.mubr.bf16.gmra.mrb[0].mxu0 %v991
        %v1111 = vpop.f32.mrb[0].mxu0
        %v1112 = vadd.f32 %v1019, %v1111
        %v1113 = vpop.f32.mrb[0].mxu0
        %v1114 = vpop.f32.mrb[0].mxu0
        %v1115 = vadd.f32 %v1019, %v1114
        %v1116 = vpop.f32.mrb[0].mxu0
        %1117 = vmatprep.mubr.bf16.mxu0 0
        %1118 = vmatmul.mubr.bf16.gmra.mrb[0].mxu0 %v992
        %v1119 = vpop.f32.mrb[0].mxu0
        %v1120 = vadd.f32 %v1019, %v1119
        %v1121 = vpop.f32.mrb[0].mxu0
        %v1122 = vpop.f32.mrb[0].mxu0
        %v1123 = vadd.f32 %v1019, %v1122
        %v1124 = vpop.f32.mrb[0].mxu0
        %1125 = vmatprep.mubr.bf16.mxu0 0
        %1126 = vmatmul.mubr.bf16.gmra.mrb[0].mxu0 %v993
        %v1127 = vpop.f32.mrb[0].mxu0
        %v1128 = vadd.f32 %v1019, %v1127
        %v1129 = vpop.f32.mrb[0].mxu0
        %v1130 = vpop.f32.mrb[0].mxu0
        %v1131 = vadd.f32 %v1019, %v1130
        %v1132 = vpop.f32.mrb[0].mxu0
        %1133 = vmatprep.mubr.bf16.mxu0 0
        %1134 = vmatmul.mubr.bf16.gmra.mrb[0].mxu0 %v994
        %v1135 = vpop.f32.mrb[0].mxu0
        %v1136 = vadd.f32 %v1019, %v1135
        %v1137 = vpop.f32.mrb[0].mxu0
        %v1138 = vpop.f32.mrb[0].mxu0
        %v1139 = vadd.f32 %v1019, %v1138
        %v1140 = vpop.f32.mrb[0].mxu0
        %1141 = vmatprep.mubr.bf16.mxu0 0
        %1142 = vmatmul.mubr.bf16.gmra.mrb[0].mxu0 %v995
        %v1143 = vpop.f32.mrb[0].mxu0
        %v1144 = vadd.f32 %v1019, %v1143
        %v1145 = vpop.f32.mrb[0].mxu0
        %v1146 = vpop.f32.mrb[0].mxu0
        %v1147 = vadd.f32 %v1019, %v1146
        %v1148 = vpop.f32.mrb[0].mxu0
        %1149 = vmatprep.mubr.bf16.mxu0 0
        %1150 = vmatmul.mubr.bf16.gmra.mrb[0].mxu0 %v996
        %v1151 = vpop.f32.mrb[0].mxu0
        %v1152 = vadd.f32 %v1019, %v1151
        %v1153 = vpop.f32.mrb[0].mxu0
        %v1154 = vpop.f32.mrb[0].mxu0
        %v1155 = vadd.f32 %v1019, %v1154
        %v1156 = vpop.f32.mrb[0].mxu0
        %1157 = vmatprep.mubr.bf16.mxu0 0
        %1158 = vmatmul.mubr.bf16.gmra.mrb[0].mxu0 %v997
        %v1159 = vpop.f32.mrb[0].mxu0
        %v1160 = vadd.f32 %v1019, %v1159
        %v1161 = vpop.f32.mrb[0].mxu0
        %v1162 = vpop.f32.mrb[0].mxu0
        %v1163 = vadd.f32 %v1019, %v1162
        %v1164 = vpop.f32.mrb[0].mxu0
        %1165 = vdwg.mxu0
        %v1166 = vpack.c.bf16 %v1107, %v1104
        %v1167 = vpack.c.bf16 %v1115, %v1112
        %v1168 = vpack.c.bf16 %v1123, %v1120
        %v1169 = vpack.c.bf16 %v1131, %v1128
        %v1170 = vpack.c.bf16 %v1139, %v1136
        %v1171 = vpack.c.bf16 %v1147, %v1144
        %v1172 = vpack.c.bf16 %v1155, %v1152
        %v1173 = vpack.c.bf16 %v1163, %v1160
        %v1174 = vld [vmem:[%s6] sm:$0xf]
        %1175 = vmatprep.subr.bf16.mxu0 0
        %1176 = vmatpush1.bf16.xpose.msra.mxu0 %v1166
        %1177 = vmatprep.subr.bf16.mxu0 0
        %1178 = vmatpush1.bf16.xpose.msra.mxu0 %v1167
        %1179 = vmatprep.subr.bf16.mxu0 0
        %1180 = vmatpush1.bf16.xpose.msra.mxu0 %v1168
        %1181 = vmatprep.subr.bf16.mxu0 0
        %1182 = vmatpush1.bf16.xpose.msra.mxu0 %v1169
        %1183 = vmatprep.subr.bf16.mxu0 0
        %1184 = vmatpush1.bf16.xpose.msra.mxu0 %v1170
        %1185 = vmatprep.subr.bf16.mxu0 0
        %1186 = vmatpush1.bf16.xpose.msra.mxu0 %v1171
        %1187 = vmatprep.subr.bf16.mxu0 0
        %1188 = vmatpush1.bf16.xpose.msra.mxu0 %v1172
        %1189 = vmatprep.subr.bf16.mxu0 0
        %1190 = vmatpush1.bf16.xpose.msra.mxu0 %v1173
        %1191 = vmatprep.subr.bf16.mxu0 0
        %1192 = vmatpush1.bf16.xpose.msra.mxu0 0
        %1193 = vmatprep.subr.bf16.mxu0 0
        %1194 = vmatpush1.bf16.xpose.msra.mxu0 0
        %1195 = vmatprep.subr.bf16.mxu0 0
        %1196 = vmatpush1.bf16.xpose.msra.mxu0 0
        %1197 = vmatprep.subr.bf16.mxu0 0
        %1198 = vmatpush1.bf16.xpose.msra.mxu0 0
        %1199 = vmatprep.subr.bf16.mxu0 0
        %1200 = vmatpush1.bf16.xpose.msra.mxu0 0
        %1201 = vmatprep.subr.bf16.mxu0 0
        %1202 = vmatpush1.bf16.xpose.msra.mxu0 0
        %1203 = vmatprep.subr.bf16.mxu0 0
        %1204 = vmatpush1.bf16.xpose.msra.mxu0 0
        %1205 = vmatprep.subr.bf16.mxu0 0
        %1206 = vmatpush1.bf16.xpose.msra.mxu0 0
        %1207 = vmatprep.mubr.bf16.mxu0 0
        %1208 = vmatmul.mubr.bf16.gmra.mrb[0].mxu0 %v1174
        %v1209 = vpop.f32.mrb[0].mxu0
        %v1210 = vadd.f32 0.0, %v1209
        %v1211 = vpop.f32.mrb[0].mxu0
        %v1212 = vpop.f32.mrb[0].mxu0
        %v1213 = vpop.f32.mrb[0].mxu0
        %1214 = vdwg.mxu0
        %v1215 = vmul.f32 %v1210, 0.088388346
        %v1216 = vld [vmem:[%s501] sm:$0x1]
        %vm1217 = vcmp.gt.f32.partialorder %v1216, 0.0
        %v1218 = vsel %vm1217, 1, 0
        %v1219 = vlaneseq
        %v1220 = vshrl.u32 %v1219, 7
        %v1221 = vsub.s32 0, %v1220
        %v1222 = vrot.slane %v1218, %v1221
        %vm1223 = vcmp.eq.s32.totalorder %v1222, 1
        %v1224 = vsel %vm1223, %v1215, -1e+09
        %1225 = vmax.xlane.f32.xlu0 %v1224
        %v1226 = vpop.xlane.xlu0 %1225
        %v1227 = vsub.f32 %v1224, %v1226
        %v1228 = vmul.f32 %v1227, 1.442695
        %v1229 = vpow.pop %v1228
        %v1231 = vlaneseq
        %v1232 = vshrl.u32 %v1231, 7
        %v1233 = vsub.s32 0, %v1232
        %v1234 = vrot.slane %v1216, %v1233
        %v1236 = vmul.f32 %v1229, %v1234
        %1237 = vadd.xlane.f32.xlu0 %v1236
        %v1238 = vpop.xlane.xlu0 %1237
        %vm1239 = vcmp.gt.f32.partialorder %v1238, 0.0
        %v1240 = vsel %vm1239, %v1238, 1.0
        %v1241 = vrcp.pop %v1240
        %v1242 = vmul.f32 %v1236, %v1241
        %v1243 = vpack.c.bf16 %v1242, %v1242
        %1244 = vmatprep.subr.bf16.mxu0 0
        %1245 = vmatpush1.bf16.msra.mxu0 %v990
        %1246 = vmatprep.subr.bf16.mxu0 0
        %1247 = vmatpush1.bf16.msra.mxu0 %v991
        %1248 = vmatprep.subr.bf16.mxu0 0
        %1249 = vmatpush1.bf16.msra.mxu0 %v992
        %1250 = vmatprep.subr.bf16.mxu0 0
        %1251 = vmatpush1.bf16.msra.mxu0 %v993
        %1252 = vmatprep.subr.bf16.mxu0 0
        %1253 = vmatpush1.bf16.msra.mxu0 %v994
        %1254 = vmatprep.subr.bf16.mxu0 0
        %1255 = vmatpush1.bf16.msra.mxu0 %v995
        %1256 = vmatprep.subr.bf16.mxu0 0
        %1257 = vmatpush1.bf16.msra.mxu0 %v996
        %1258 = vmatprep.subr.bf16.mxu0 0
        %1259 = vmatpush1.bf16.msra.mxu0 %v997
        %1260 = vmatprep.subr.bf16.mxu0 0
        %1261 = vmatpush1.bf16.msra.mxu0 0
        %1262 = vmatprep.subr.bf16.mxu0 0
        %1263 = vmatpush1.bf16.msra.mxu0 0
        %1264 = vmatprep.subr.bf16.mxu0 0
        %1265 = vmatpush1.bf16.msra.mxu0 0
        %1266 = vmatprep.subr.bf16.mxu0 0
        %1267 = vmatpush1.bf16.msra.mxu0 0
        %1268 = vmatprep.subr.bf16.mxu0 0
        %1269 = vmatpush1.bf16.msra.mxu0 0
        %1270 = vmatprep.subr.bf16.mxu0 0
        %1271 = vmatpush1.bf16.msra.mxu0 0
        %1272 = vmatprep.subr.bf16.mxu0 0
        %1273 = vmatpush1.bf16.msra.mxu0 0
        %1274 = vmatprep.subr.bf16.mxu0 0
        %1275 = vmatpush1.bf16.msra.mxu0 0
        %1276 = vmatprep.mubr.bf16.mxu0 0
        %1277 = vmatmul.mubr.bf16.gmra.mrb[0].mxu0 %v1243
        %v1278 = vpop.f32.mrb[0].mxu0
        %v1279 = vadd.f32 0.0, %v1278
        %v1280 = vpop.f32.mrb[0].mxu0
        %v1281 = vpop.f32.mrb[0].mxu0
        %v1282 = vpop.f32.mrb[0].mxu0
        %1283 = vdwg.mxu0
        %v1284 = vpack.c.bf16 %v1279, %v1279
        %v1285 = vld [vmem:[#allocation8] sm:$0xf]
        %v1286 = vld [vmem:[#allocation8 + $0x4] sm:$0xf]
        %v1287 = vld [vmem:[#allocation8 + $0x8] sm:$0xf]
        %v1288 = vld [vmem:[#allocation8 + $0xc] sm:$0xf]
        %v1289 = vld [vmem:[#allocation8 + $0x10] sm:$0xf]
        %v1290 = vld [vmem:[#allocation8 + $0x14] sm:$0xf]
        %v1291 = vld [vmem:[#allocation8 + $0x18] sm:$0xf]
        %v1292 = vld [vmem:[#allocation8 + $0x1c] sm:$0xf]
        %v1293 = vld [vmem:[#allocation8 + $0x20] sm:$0xf]
        %v1294 = vld [vmem:[#allocation8 + $0x24] sm:$0xf]
        %v1295 = vld [vmem:[#allocation8 + $0x28] sm:$0xf]
        %v1296 = vld [vmem:[#allocation8 + $0x2c] sm:$0xf]
        %v1297 = vld [vmem:[#allocation8 + $0x30] sm:$0xf]
        %v1298 = vld [vmem:[#allocation8 + $0x34] sm:$0xf]
        %v1299 = vld [vmem:[#allocation8 + $0x38] sm:$0xf]
        %v1300 = vld [vmem:[#allocation8 + $0x3c] sm:$0xf]
        %v1301 = vld [vmem:[%s10] sm:$0x1]
        %v1303 = vlaneseq
        %v1304 = vshrl.u32 %v1303, 7
        %v1305 = vsub.s32 0, %v1304
        %v1306 = vrot.slane %v1301, %v1305
        %v1324 = vunpack.c.l.b16 %v1285
        %v1325 = vunpack.c.l.b16 %v1286
        %v1326 = vunpack.c.l.b16 %v1287
        %v1327 = vunpack.c.l.b16 %v1288
        %v1328 = vunpack.c.l.b16 %v1289
        %v1329 = vunpack.c.l.b16 %v1290
        %v1330 = vunpack.c.l.b16 %v1291
        %v1331 = vunpack.c.l.b16 %v1292
        %v1332 = vunpack.c.l.b16 %v1293
        %v1333 = vunpack.c.l.b16 %v1294
        %v1334 = vunpack.c.l.b16 %v1295
        %v1335 = vunpack.c.l.b16 %v1296
        %v1336 = vunpack.c.l.b16 %v1297
        %v1337 = vunpack.c.l.b16 %v1298
        %v1338 = vunpack.c.l.b16 %v1299
        %v1339 = vunpack.c.l.b16 %v1300
        %v1340 = vpack.c.b16 %v1325, %v1324
        %v1341 = vpack.c.b16 %v1327, %v1326
        %v1342 = vpack.c.b16 %v1329, %v1328
        %v1343 = vpack.c.b16 %v1331, %v1330
        %v1344 = vpack.c.b16 %v1333, %v1332
        %v1345 = vpack.c.b16 %v1335, %v1334
        %v1346 = vpack.c.b16 %v1337, %v1336
        %v1347 = vpack.c.b16 %v1339, %v1338
        %1356 = vmatprep.subr.bf16.mxu0 0
        %1357 = vmatpush1.bf16.msra.mxu0 %v1340
        %1358 = vmatprep.subr.bf16.mxu0 0
        %1359 = vmatpush1.bf16.msra.mxu0 %v1341
        %1360 = vmatprep.subr.bf16.mxu0 0
        %1361 = vmatpush1.bf16.msra.mxu0 %v1342
        %1362 = vmatprep.subr.bf16.mxu0 0
        %1363 = vmatpush1.bf16.msra.mxu0 %v1343
        %1364 = vmatprep.subr.bf16.mxu0 0
        %1365 = vmatpush1.bf16.msra.mxu0 %v1344
        %1366 = vmatprep.subr.bf16.mxu0 0
        %1367 = vmatpush1.bf16.msra.mxu0 %v1345
        %1368 = vmatprep.subr.bf16.mxu0 0
        %1369 = vmatpush1.bf16.msra.mxu0 %v1346
        %1370 = vmatprep.subr.bf16.mxu0 0
        %1371 = vmatpush1.bf16.msra.mxu0 %v1347
        %1372 = vmatprep.subr.bf16.mxu0 0
        %1373 = vmatpush1.bf16.msra.mxu0 0
        %1374 = vmatprep.subr.bf16.mxu0 0
        %1375 = vmatpush1.bf16.msra.mxu0 0
        %1376 = vmatprep.subr.bf16.mxu0 0
        %1377 = vmatpush1.bf16.msra.mxu0 0
        %1378 = vmatprep.subr.bf16.mxu0 0
        %1379 = vmatpush1.bf16.msra.mxu0 0
        %1380 = vmatprep.subr.bf16.mxu0 0
        %1381 = vmatpush1.bf16.msra.mxu0 0
        %1382 = vmatprep.subr.bf16.mxu0 0
        %1383 = vmatpush1.bf16.msra.mxu0 0
        %1384 = vmatprep.subr.bf16.mxu0 0
        %1385 = vmatpush1.bf16.msra.mxu0 0
        %1386 = vmatprep.subr.bf16.mxu0 0
        %1387 = vmatpush1.bf16.msra.mxu0 0
        %1388 = vmatprep.mubr.bf16.mxu0 0
        %1389 = vmatmul.mubr.bf16.gmra.mrb[0].mxu0 %v1284
        %v1390 = vpop.f32.mrb[0].mxu0
        %v1391 = vadd.f32 %v1306, %v1390
        %v1392 = vpop.f32.mrb[0].mxu0
        %v1393 = vpop.f32.mrb[0].mxu0
        %v1394 = vpop.f32.mrb[0].mxu0
        %1395 = vdwg.mxu0
        %1396 = vst [vmem:[%s490] sm:$0xff] %v1391
        %1397 = vst [vmem:[%s497] sm:$0xff] %v1242
        %s1398 = sand.u32 %s284, 1
        %s1399 = scalar_lea.sflag [#allocation4], %s1398
        %s1400 = sand.u32 %s284, 1
        %s1401 = smul.addr %s1400, 8
        %s1402 = scalar_lea.vmem [#allocation10], %s1401
        %s1403 = sand.u32 %s310, 1
        %s1404 = scalar_lea.sflag [#allocation12], %s1403
        %s1405 = sand.u32 %s310, 1
        %s1406 = smul.addr %s1405, 8
        %s1407 = scalar_lea.vmem [#allocation11], %s1406
        // Predicated region
        $region81: #{tpu_custom_call.1} parent=63 // pred_check
          %p1408 = pneg %p294
        $region82: #{tpu_custom_call.1} parent=63 // pred_check_branch
          %1410 = sbr.rel (%p1408) target = $region84
        $region83: #{tpu_custom_call.1} parent=63 // pred_region
          %s1412 = ssub.s32 128, 128
          %1413 = vsyncadd %s1399, %s1412
          %s1414 = smul.addr %s35, 128
          %s1415 = scalar_lea.hbm %s11, %s1414
          %s1417 = sshll.u32 %s1402, 4
          %s1418 = int_to_ptr.vmem [resolvable:$true] %s1417
          %1420 = dma.vmem_to_hbm [thread:$0]  %s1418, 128, %s1415, %s1399
        $region84: #{tpu_custom_call.1} parent=63 // pred_fallthru
          _
        // Predicated region
        $region85: #{tpu_custom_call.1} parent=63 // pred_check
          %p1421 = pneg %p320
        $region86: #{tpu_custom_call.1} parent=63 // pred_check_branch
          %1423 = sbr.rel (%p1421) target = $region88
        $region87: #{tpu_custom_call.1} parent=63 // pred_region
          %s1425 = ssub.s32 128, 128
          %1426 = vsyncadd %s1404, %s1425
          %s1427 = smul.addr %s35, 128
          %s1428 = scalar_lea.hbm %s12, %s1427
          %s1430 = sshll.u32 %s1407, 4
          %s1431 = int_to_ptr.vmem [resolvable:$true] %s1430
          %1433 = dma.vmem_to_hbm [thread:$0]  %s1431, 128, %s1428, %s1404
        $region88: #{tpu_custom_call.1} parent=63 // pred_fallthru
          _
      $region64: #{tpu_custom_call.1} parent=5 // pred_fallthru
        _
      %p1434 = scmp.le.s32.totalorder 2, %s30
      // Predicated region
      $region89: #{tpu_custom_call.1} parent=5 // pred_check
        %p1435 = pneg %p1434
      $region90: #{tpu_custom_call.1} parent=5 // pred_check_branch
        %1437 = sbr.rel (%p1435) target = $region92
      $region91: #{tpu_custom_call.1} parent=5 // pred_region
        %s1438 = ssub.s32 %s30, 2
        // Predicated region
        $region93: #{tpu_custom_call.1} parent=91 // pred_check
          %p1439 = pneg %p300
        $region94: #{tpu_custom_call.1} parent=91 // pred_check_branch
          %1441 = sbr.rel (%p1439) target = $region96
        $region95: #{tpu_custom_call.1} parent=91 // pred_region
          %s1442 = sand.u32 %s285, 1
          %s1443 = scalar_lea.sflag [#allocation4], %s1442
          %s1444 = sand.u32 %s285, 1
          %s1445 = smul.addr %s1444, 8
          %s1446 = scalar_lea.vmem [#allocation10], %s1445
          %1447 = dma.done %s1443, 128
        $region96: #{tpu_custom_call.1} parent=91 // pred_fallthru
          _
        // Predicated region
        $region97: #{tpu_custom_call.1} parent=91 // pred_check
          %p1448 = pneg %p326
        $region98: #{tpu_custom_call.1} parent=91 // pred_check_branch
          %1450 = sbr.rel (%p1448) target = $region100
        $region99: #{tpu_custom_call.1} parent=91 // pred_region
          %s1451 = sand.u32 %s311, 1
          %s1452 = scalar_lea.sflag [#allocation12], %s1451
          %s1453 = sand.u32 %s311, 1
          %s1454 = smul.addr %s1453, 8
          %s1455 = scalar_lea.vmem [#allocation11], %s1454
          %1456 = dma.done %s1452, 128
        $region100: #{tpu_custom_call.1} parent=91 // pred_fallthru
          _
      $region92: #{tpu_custom_call.1} parent=5 // pred_fallthru
        _
    $region6: #{tpu_custom_call.1} parent=1 // loop_footer
      %s34 = sadd.s32 1, %s30
    $region7: #{tpu_custom_call.1} parent=1 // loop_footer_branch
      %29 = sbr.rel target = $region3
    $region8: #{tpu_custom_call.1} parent=1 // loop_exit
      _
    %1457 = vsyncpa [#allocation3], 1
    %s1458 = scalar_lea.sflag [#allocation3], 1
    %1459 = vsyncpa %s1458, 1
    %1460 = vsyncpa [#allocation6], 1
    %1461 = vsyncpa [#allocation9], 1
    %1462 = vsyncpa [#allocation4], 1
    %s1463 = scalar_lea.sflag [#allocation4], 1
    %1464 = vsyncpa %s1463, 1
    %1465 = vsyncpa [#allocation12], 1
    %s1466 = scalar_lea.sflag [#allocation12], 1
    %1467 = vsyncpa %s1466, 1

</llo_original>
